<compile_context>
chip_gen: v7x
topology: tpu7x:2x2x1
jax: 0.10.0
libtpu: 0.0.40
codegen_flags: <defaults>
</compile_context>

<pallas_src>
import functools

import numpy as np
import jax
import jax.numpy as jnp
from jax.experimental import pallas as pl
from jax.experimental.pallas import tpu as pltpu


# --------------------------- in-kernel exact GELU --------------------------- #
def _erf(z):
    # Abramowitz & Stegun 7.1.26 rational approximation, |error| <= 1.5e-7.
    az = jnp.abs(z)
    t = 1.0 / (1.0 + 0.3275911 * az)
    poly = t * (0.254829592 + t * (-0.284496736 + t * (1.421413741
               + t * (-1.453152027 + t * 1.061405429))))
    e = 1.0 - poly * jnp.exp(-az * az)
    return jnp.where(z >= 0.0, e, -e)


def _gelu_exact(x):
    # torch nn.GELU() default: x * 0.5 * (1 + erf(x / sqrt(2)))
    return 0.5 * x * (1.0 + _erf(x * 0.7071067811865476))


# ------------------------------ Pallas kernel ------------------------------ #
def _fused_agg_kernel(x_ref, m1_ref, b1_ref, m2_ref, b2_ref, m3_ref, b3_ref,
                      o_ref, a2_scr, o_scr, *, B, H, Ho, pack, mxu_dtype):
    """Fused conv1x1+GELU -> conv3x3+GELU -> conv4x4/s2+GELU for B images.

    x_ref : (1, B*H, W*Cin)      lane-packed input rows (B images stacked)
    m1    : (W*Cin, W*Cout)      conv1 block-diagonal column mix
    m2    : (3*W*Cout, W*Cout)   conv2 per-row-tap column mixes, concat along K
    m3    : (4*W*Cout, Wo*Cout)  conv3 (stride 2 in W folded in), concat along K
    b*    : (1, width)           lane-tiled biases (f32)
    o_ref : (1, B*Ho//pack, pack*Wo*Cout)  lane-dense packed output
    """
    f32 = jnp.float32
    BH, BHo = B * H, B * Ho

    x = x_ref[0]                                                   # (BH, W*Cin)

    # ---- conv1 (1x1) + GELU : one (BH, W*Cin) @ (W*Cin, W*Cout) matmul ----
    a1 = jnp.dot(x, m1_ref[...], preferred_element_type=f32) + b1_ref[...]
    a1 = _gelu_exact(a1)                                           # (BH, WC) f32

    # Within-image row index: rolls wrap across image boundaries, and those
    # wrapped rows are exactly the zero-padded ones, so one mask handles both.
    i_img = jax.lax.broadcasted_iota(jnp.int32, (BH, 1), 0) % H

    # ---- conv2 (3x3, pad 1) + GELU : 3 row taps -> one wide-K matmul ----
    t_up = jnp.where(i_img >= 1, pltpu.roll(a1, 1, axis=0), 0.0)           # row i-1
    t_dn = jnp.where(i_img <= H - 2, pltpu.roll(a1, BH - 1, axis=0), 0.0)  # row i+1
    cat2 = jnp.concatenate([t_up, a1, t_dn], axis=-1)              # (BH, 3*WC)
    a2 = jnp.dot(cat2.astype(mxu_dtype), m2_ref[...],
                 preferred_element_type=f32) + b2_ref[...]
    a2 = _gelu_exact(a2)                                           # (BH, WC) f32

    # ---- conv3 (4x4, stride 2, pad 1) + GELU : 4 row taps -> one matmul ----
    a2_scr[...] = a2
    ev = a2_scr[pl.ds(0, BHo, stride=2), :]                        # rows 2j
    od = a2_scr[pl.ds(1, BHo, stride=2), :]                        # rows 2j+1

    j_img = jax.lax.broadcasted_iota(jnp.int32, (BHo, 1), 0) % Ho
    t_m1 = jnp.where(j_img >= 1, pltpu.roll(od, 1, axis=0), 0.0)           # row 2j-1
    t_p2 = jnp.where(2 * j_img + 2 <= H - 1,
                     pltpu.roll(ev, BHo - 1, axis=0), 0.0)                 # row 2j+2
    cat3 = jnp.concatenate([t_m1, ev, od, t_p2], axis=-1)          # (BHo, 4*WC)
    out = jnp.dot(cat3.astype(mxu_dtype), m3_ref[...],
                  preferred_element_type=f32) + b3_ref[...]
    out = _gelu_exact(out)                                         # (BHo, Wo*Cout)

    if pack == 2:
        # Lane-dense store: pack 2 consecutive output rows into 2*Wo*Cout lanes.
        o_scr[...] = out
        row_pairs = jnp.concatenate(
            [o_scr[pl.ds(0, BHo // 2, stride=2), :],
             o_scr[pl.ds(1, BHo // 2, stride=2), :]], axis=-1)     # (BHo//2, 2*WoC)
        o_ref[0] = row_pairs.astype(o_ref.dtype)
    else:
        o_ref[0] = out.astype(o_ref.dtype)


# ----------------------- weight -> matmul-form glue ------------------------ #
def _tap_placement(K, size_in, stride, pad):
    """Static selection matrices P: (K, size_out, size_in),
    P[k, i, s] = 1 iff s == i*stride + k - pad and 0 <= s < size_in."""
    size_out = (size_in + 2 * pad - K) // stride + 1
    P = np.zeros((K, size_out, size_in), np.float32)
    for k in range(K):
        for i in range(size_out):
            s = i * stride + k - pad
            if 0 <= s < size_in:
                P[k, i, s] = 1.0
    return P


def _col_mix_matrices(w_oihw, W_in, stride, pad):
    """Per-row-tap lane-mixing matrices M: (KH, W_in*Cin, W_out*Cout) with
    M[ky, (j*stride+kx-pad)*Cin + c, j*Cout + o] = w[o, c, ky, kx] (in-range taps
    only). Column padding / stride are folded in; out-of-range taps vanish."""
    Cout, Cin, KH, KW = w_oihw.shape
    P = _tap_placement(KW, W_in, stride, pad)                     # (KW, W_out, W_in)
    W_out = P.shape[1]
    M = jnp.einsum("kjs,ocyk->yscjo", jnp.asarray(P, jnp.float32),
                   w_oihw.astype(jnp.float32))
    return M.reshape(KH, W_in * Cin, W_out * Cout)


# --------------------------------- wrapper --------------------------------- #
def aggregation_block_forward(x_nchw, params, *, use_bf16=True, batch_block=8):
    """Full AggregationBlock forward. Input NCHW (like PyTorch), output NCHW."""
    (w1, b1), (w2, b2), (w3, b3) = params
    N, Cin, H, W = x_nchw.shape
    Cout = w1.shape[0]
    dt = x_nchw.dtype

    # conv3 (k=4, s=2, p=1) output geometry
    Ho = (H + 2 * 1 - 4) // 2 + 1
    Wo = (W + 2 * 1 - 4) // 2 + 1
    assert H % 2 == 0, "kernel assumes even H (stride-2 row select via even/odd split)"

    # Fold B images per grid step -> matmul M dimension becomes B*H rows.
    B = 1
    for b in range(min(N, batch_block), 0, -1):
        if N % b == 0:
            B = b
            break
    Nb = N // B
    BH, BHo = B * H, B * Ho
    WCin, WC, WoC = W * Cin, W * Cout, Wo * Cout

    mxu_dtype = jnp.bfloat16 if use_bf16 else jnp.float32

    # NCHW -> NHWC -> lane-packed rows, B images stacked per block.
    x_rows = (jnp.transpose(x_nchw, (0, 2, 3, 1))
              .reshape(Nb, BH, WCin).astype(mxu_dtype))

    # conv1 (1x1): block-diagonal column-mix matrix.
    M1 = _col_mix_matrices(w1, W, stride=1, pad=0)[0].astype(mxu_dtype)    # (WCin, WC)
    b1t = jnp.tile(b1.astype(jnp.float32), W).reshape(1, WC)

    # conv2 (3x3, pad 1): per-row-tap column mixes concatenated along K.
    M2cat = (_col_mix_matrices(w2, W, stride=1, pad=1)
             .reshape(3 * WC, WC).astype(mxu_dtype))
    b2t = jnp.tile(b2.astype(jnp.float32), W).reshape(1, WC)

    # conv3 (4x4, stride 2, pad 1): W-direction stride folded into the columns.
    M3cat = (_col_mix_matrices(w3, W, stride=2, pad=1)
             .reshape(4 * WC, WoC).astype(mxu_dtype))
    b3t = jnp.tile(b3.astype(jnp.float32), Wo).reshape(1, WoC)

    # Lane-dense output: pack pairs of consecutive output rows into 2*WoC lanes.
    pack = 2 if BHo % 2 == 0 else 1
    out_rows, out_lanes = BHo // pack, pack * WoC

    kernel = functools.partial(_fused_agg_kernel, B=B, H=H, Ho=Ho,
                               pack=pack, mxu_dtype=mxu_dtype)

    out_packed = pl.pallas_call(
        kernel,
        out_shape=jax.ShapeDtypeStruct((Nb, out_rows, out_lanes), dt),
        grid_spec=pltpu.PrefetchScalarGridSpec(
            num_scalar_prefetch=0,
            grid=(Nb,),                                   # one block of B images/step
            in_specs=[
                pl.BlockSpec((1, BH, WCin), lambda n: (n, 0, 0)),
                pl.BlockSpec((WCin, WC), lambda n: (0, 0)),
                pl.BlockSpec((1, WC), lambda n: (0, 0)),
                pl.BlockSpec((3 * WC, WC), lambda n: (0, 0)),
                pl.BlockSpec((1, WC), lambda n: (0, 0)),
                pl.BlockSpec((4 * WC, WoC), lambda n: (0, 0)),
                pl.BlockSpec((1, WoC), lambda n: (0, 0)),
            ],
            out_specs=pl.BlockSpec((1, out_rows, out_lanes), lambda n: (n, 0, 0)),
            scratch_shapes=[
                pltpu.VMEM((BH, WC), jnp.float32),     # a2 (strided row select)
                pltpu.VMEM((BHo, WoC), jnp.float32),   # conv3 out (lane packing)
            ],
        ),
        compiler_params=pltpu.CompilerParams(
            dimension_semantics=("parallel",),          # image blocks shard across TCs
        ),
    )(x_rows, M1, b1t, M2cat, b2t, M3cat, b3t)

    # Undo the lane packing (flat element order was preserved -> pure reshape).
    return jnp.transpose(out_packed.reshape(N, Ho, Wo, Cout), (0, 3, 1, 2))


# ----------------------------- pure-JAX reference --------------------------- #
def _ref_forward(x_nchw, params):
    x = jnp.transpose(x_nchw, (0, 2, 3, 1))

    def conv_gelu(h, w_oihw, b, stride, pad):
        w_hwio = jnp.transpose(w_oihw, (2, 3, 1, 0))
        y = jax.lax.conv_general_dilated(
            h, w_hwio, window_strides=(stride, stride),
            padding=[(pad, pad), (pad, pad)],
            dimension_numbers=("NHWC", "HWIO", "NHWC"),
            precision=jax.lax.Precision.HIGHEST)
        return jax.nn.gelu(y + b.reshape(1, 1, 1, -1), approximate=False)

    (w1, b1), (w2, b2), (w3, b3) = params
    h = conv_gelu(x, w1, b1, 1, 0)
    h = conv_gelu(h, w2, b2, 1, 1)
    h = conv_gelu(h, w3, b3, 2, 1)
    return jnp.transpose(h, (0, 3, 1, 2))


# -------------------------------- param init -------------------------------- #
def _init_conv(key, cout, cin, kh, kw):
    # Deterministic analogue of PyTorch Conv2d default init (U(+/- 1/sqrt(fan_in))).
    k_w, k_b = jax.random.split(key)
    fan_in = cin * kh * kw
    bound = 1.0 / np.sqrt(fan_in)
    w = jax.random.uniform(k_w, (cout, cin, kh, kw), jnp.float32, -bound, bound)
    b = jax.random.uniform(k_b, (cout,), jnp.float32, -bound, bound)
    return w, b


if __name__ == "__main__":
    in_channels, out_channels = 4, 8
    N, H, W = 2, 16, 16

    key = jax.random.PRNGKey(0)
    kx, k1, k2, k3 = jax.random.split(key, 4)

    x = jax.random.normal(kx, (N, in_channels, H, W), jnp.float32)   # NCHW input
    params = (
        _init_conv(k1, out_channels, in_channels, 1, 1),   # conv1: 1x1
        _init_conv(k2, out_channels, out_channels, 3, 3),  # conv2: 3x3, pad 1
        _init_conv(k3, out_channels, out_channels, 4, 4),  # conv3: 4x4, s2, pad 1
    )

    ref = jax.block_until_ready(_ref_forward(x, params))

    # f32-operand path: validates the fused conv/GELU math (tolerance kept
    # conservative to be robust to MXU f32 pass-decomposition defaults).
    out_f32 = jax.block_until_ready(
        jax.jit(functools.partial(aggregation_block_forward, use_bf16=False))(x, params))
    assert out_f32.shape == (N, out_channels, H // 2, W // 2), out_f32.shape
    np.testing.assert_allclose(np.asarray(out_f32), np.asarray(ref),
                               rtol=2e-2, atol=2e-2)

    # bf16-MXU-operand path (default performance path), f32 accumulation.
    out_bf16 = jax.block_until_ready(
        jax.jit(functools.partial(aggregation_block_forward, use_bf16=True))(x, params))
    assert out_bf16.shape == (N, out_channels, H // 2, W // 2), out_bf16.shape
    np.testing.assert_allclose(np.asarray(out_bf16), np.asarray(ref),
                               rtol=5e-2, atol=5e-2)

    print("KERNEL_OK")
</pallas_src>

<mosaic_0001>
module attributes {stable_mosaic.version = 11 : i64} {
  func.func @_fused_agg_kernel(%arg0: i32, %arg1: memref<1x32x64xf32, #tpu.memory_space<vmem>>, %arg2: memref<64x128xf32, #tpu.memory_space<vmem>>, %arg3: memref<1x128xf32, #tpu.memory_space<vmem>>, %arg4: memref<384x128xf32, #tpu.memory_space<vmem>>, %arg5: memref<1x128xf32, #tpu.memory_space<vmem>>, %arg6: memref<512x64xf32, #tpu.memory_space<vmem>>, %arg7: memref<1x64xf32, #tpu.memory_space<vmem>>, %arg8: memref<1x8x128xf32, #tpu.memory_space<vmem>>, %arg9: memref<32x128xf32, #tpu.memory_space<vmem>>, %arg10: memref<16x64xf32, #tpu.memory_space<vmem>>) attributes {dimension_semantics = [#tpu.dimension_semantics<parallel>], iteration_bounds = array<i64: 1>, scalar_prefetch = 0 : i64, scratch_operands = 2 : i64, tpu.core_type = #tpu.core_type<tc>, window_params = [{transform_indices = @transform_0, window_bounds = array<i64: 1, 32, 64>}, {pipeline_mode = #tpu.pipeline_mode<synchronous>, transform_indices = @transform_1, window_bounds = array<i64: 64, 128>}, {pipeline_mode = #tpu.pipeline_mode<synchronous>, transform_indices = @transform_2, window_bounds = array<i64: 1, 128>}, {pipeline_mode = #tpu.pipeline_mode<synchronous>, transform_indices = @transform_3, window_bounds = array<i64: 384, 128>}, {pipeline_mode = #tpu.pipeline_mode<synchronous>, transform_indices = @transform_4, window_bounds = array<i64: 1, 128>}, {pipeline_mode = #tpu.pipeline_mode<synchronous>, transform_indices = @transform_5, window_bounds = array<i64: 512, 64>}, {pipeline_mode = #tpu.pipeline_mode<synchronous>, transform_indices = @transform_6, window_bounds = array<i64: 1, 64>}, {transform_indices = @transform_7, window_bounds = array<i64: 1, 8, 128>}]} {
    %c0 = arith.constant 0 : index
    %c0_0 = arith.constant 0 : index
    %c0_1 = arith.constant 0 : index
    %0 = vector.load %arg1[%c0, %c0_0, %c0_1] : memref<1x32x64xf32, #tpu.memory_space<vmem>>, vector<1x32x64xf32>
    %1 = vector.shape_cast %0 : vector<1x32x64xf32> to vector<32x64xf32>
    %c0_2 = arith.constant 0 : index
    %c0_3 = arith.constant 0 : index
    %2 = vector.load %arg2[%c0_2, %c0_3] : memref<64x128xf32, #tpu.memory_space<vmem>>, vector<64x128xf32>
    %cst = arith.constant dense<0.000000e+00> : vector<32x128xf32>
    %3 = tpu.matmul %1, %2, %cst {dimension_numbers = #tpu.dot_dimension_numbers<[1], [0], [0], [1], [0, 0, 1, 1], [], []>} : vector<32x64xf32>, vector<64x128xf32>, vector<32x128xf32> -> vector<32x128xf32>
    %c0_4 = arith.constant 0 : index
    %c0_5 = arith.constant 0 : index
    %4 = vector.load %arg3[%c0_4, %c0_5] : memref<1x128xf32, #tpu.memory_space<vmem>>, vector<1x128xf32>
    %5 = vector.broadcast %4 : vector<1x128xf32> to vector<32x128xf32>
    %6 = arith.addf %3, %5 : vector<32x128xf32>
    %cst_6 = arith.constant 5.000000e-01 : f32
    %7 = vector.broadcast %cst_6 : f32 to vector<32x128xf32>
    %8 = arith.mulf %7, %6 : vector<32x128xf32>
    %cst_7 = arith.constant 0.707106769 : f32
    %9 = vector.broadcast %cst_7 : f32 to vector<32x128xf32>
    %10 = arith.mulf %6, %9 : vector<32x128xf32>
    %11 = math.absf %10 : vector<32x128xf32>
    %cst_8 = arith.constant 0.327591091 : f32
    %12 = vector.broadcast %cst_8 : f32 to vector<32x128xf32>
    %13 = arith.mulf %12, %11 : vector<32x128xf32>
    %cst_9 = arith.constant 1.000000e+00 : f32
    %14 = vector.broadcast %cst_9 : f32 to vector<32x128xf32>
    %15 = arith.addf %14, %13 : vector<32x128xf32>
    %cst_10 = arith.constant 1.000000e+00 : f32
    %16 = vector.broadcast %cst_10 : f32 to vector<32x128xf32>
    %17 = arith.divf %16, %15 : vector<32x128xf32>
    %cst_11 = arith.constant 1.06140542 : f32
    %18 = vector.broadcast %cst_11 : f32 to vector<32x128xf32>
    %19 = arith.mulf %17, %18 : vector<32x128xf32>
    %cst_12 = arith.constant -1.45315206 : f32
    %20 = vector.broadcast %cst_12 : f32 to vector<32x128xf32>
    %21 = arith.addf %20, %19 : vector<32x128xf32>
    %22 = arith.mulf %17, %21 : vector<32x128xf32>
    %cst_13 = arith.constant 1.42141378 : f32
    %23 = vector.broadcast %cst_13 : f32 to vector<32x128xf32>
    %24 = arith.addf %23, %22 : vector<32x128xf32>
    %25 = arith.mulf %17, %24 : vector<32x128xf32>
    %cst_14 = arith.constant -0.284496725 : f32
    %26 = vector.broadcast %cst_14 : f32 to vector<32x128xf32>
    %27 = arith.addf %26, %25 : vector<32x128xf32>
    %28 = arith.mulf %17, %27 : vector<32x128xf32>
    %cst_15 = arith.constant 0.254829586 : f32
    %29 = vector.broadcast %cst_15 : f32 to vector<32x128xf32>
    %30 = arith.addf %29, %28 : vector<32x128xf32>
    %31 = arith.mulf %17, %30 : vector<32x128xf32>
    %cst_16 = arith.constant 0.000000e+00 : f32
    %32 = vector.broadcast %cst_16 : f32 to vector<32x128xf32>
    %33 = arith.subf %32, %11 : vector<32x128xf32>
    %34 = arith.mulf %33, %11 : vector<32x128xf32>
    %35 = math.exp %34 : vector<32x128xf32>
    %36 = arith.mulf %31, %35 : vector<32x128xf32>
    %cst_17 = arith.constant 1.000000e+00 : f32
    %37 = vector.broadcast %cst_17 : f32 to vector<32x128xf32>
    %38 = arith.subf %37, %36 : vector<32x128xf32>
    %cst_18 = arith.constant 0.000000e+00 : f32
    %39 = vector.broadcast %cst_18 : f32 to vector<32x128xf32>
    %40 = arith.cmpf oge, %10, %39 : vector<32x128xf32>
    %cst_19 = arith.constant 0.000000e+00 : f32
    %41 = vector.broadcast %cst_19 : f32 to vector<32x128xf32>
    %42 = arith.subf %41, %38 : vector<32x128xf32>
    %43 = arith.select %40, %38, %42 : vector<32x128xi1>, vector<32x128xf32>
    %cst_20 = arith.constant 1.000000e+00 : f32
    %44 = vector.broadcast %cst_20 : f32 to vector<32x128xf32>
    %45 = arith.addf %44, %43 : vector<32x128xf32>
    %46 = arith.mulf %8, %45 : vector<32x128xf32>
    %47 = tpu.iota {dimensions = array<i32: 0>} : vector<32x1xi32>
    %c16_i32 = arith.constant 16 : i32
    %c0_i32 = arith.constant 0 : i32
    %48 = arith.cmpi eq, %c16_i32, %c0_i32 : i32
    %c1_i32 = arith.constant 1 : i32
    %49 = arith.select %48, %c1_i32, %c16_i32 : i32
    %50 = vector.broadcast %49 : i32 to vector<32x1xi32>
    %51 = arith.remsi %47, %50 : vector<32x1xi32>
    %c0_i32_21 = arith.constant 0 : i32
    %52 = vector.broadcast %c0_i32_21 : i32 to vector<32x1xi32>
    %53 = arith.cmpi ne, %51, %52 : vector<32x1xi32>
    %c0_i32_22 = arith.constant 0 : i32
    %54 = vector.broadcast %c0_i32_22 : i32 to vector<32x1xi32>
    %55 = arith.cmpi slt, %51, %54 : vector<32x1xi32>
    %c0_i32_23 = arith.constant 0 : i32
    %56 = arith.cmpi slt, %49, %c0_i32_23 : i32
    %57 = vector.broadcast %56 : i1 to vector<32x1xi1>
    %58 = vector.broadcast %57 : vector<32x1xi1> to vector<32x1xi1>
    %59 = arith.xori %55, %58 : vector<32x1xi1>
    %60 = arith.andi %59, %53 : vector<32x1xi1>
    %61 = vector.broadcast %49 : i32 to vector<32x1xi32>
    %62 = arith.addi %51, %61 : vector<32x1xi32>
    %63 = arith.select %60, %62, %51 : vector<32x1xi1>, vector<32x1xi32>
    %c1_i32_24 = arith.constant 1 : i32
    %64 = vector.broadcast %c1_i32_24 : i32 to vector<32x1xi32>
    %65 = arith.cmpi sge, %63, %64 : vector<32x1xi32>
    %c1_i32_25 = arith.constant 1 : i32
    %66 = tpu.dynamic_rotate %46 by %c1_i32_25 dim 0 : vector<32x128xf32>, i32 -> vector<32x128xf32>
    %cst_26 = arith.constant 0.000000e+00 : f32
    %67 = vector.shape_cast %65 : vector<32x1xi1> to vector<32x1xi1>
    %68 = vector.broadcast %67 : vector<32x1xi1> to vector<32x128xi1>
    %69 = vector.broadcast %cst_26 : f32 to vector<32x128xf32>
    %70 = arith.select %68, %66, %69 : vector<32x128xi1>, vector<32x128xf32>
    %c14_i32 = arith.constant 14 : i32
    %71 = vector.broadcast %c14_i32 : i32 to vector<32x1xi32>
    %72 = arith.cmpi sle, %63, %71 : vector<32x1xi32>
    %c31_i32 = arith.constant 31 : i32
    %73 = tpu.dynamic_rotate %46 by %c31_i32 dim 0 : vector<32x128xf32>, i32 -> vector<32x128xf32>
    %cst_27 = arith.constant 0.000000e+00 : f32
    %74 = vector.shape_cast %72 : vector<32x1xi1> to vector<32x1xi1>
    %75 = vector.broadcast %74 : vector<32x1xi1> to vector<32x128xi1>
    %76 = vector.broadcast %cst_27 : f32 to vector<32x128xf32>
    %77 = arith.select %75, %73, %76 : vector<32x128xi1>, vector<32x128xf32>
    %78 = tpu.concatenate %70, %46, %77 in 1 : vector<32x128xf32>, vector<32x128xf32>, vector<32x128xf32> -> vector<32x384xf32>
    %c0_28 = arith.constant 0 : index
    %c0_29 = arith.constant 0 : index
    %79 = vector.load %arg4[%c0_28, %c0_29] : memref<384x128xf32, #tpu.memory_space<vmem>>, vector<384x128xf32>
    %cst_30 = arith.constant dense<0.000000e+00> : vector<32x128xf32>
    %80 = tpu.matmul %78, %79, %cst_30 {dimension_numbers = #tpu.dot_dimension_numbers<[1], [0], [0], [1], [0, 0, 1, 1], [], []>} : vector<32x384xf32>, vector<384x128xf32>, vector<32x128xf32> -> vector<32x128xf32>
    %c0_31 = arith.constant 0 : index
    %c0_32 = arith.constant 0 : index
    %81 = vector.load %arg5[%c0_31, %c0_32] : memref<1x128xf32, #tpu.memory_space<vmem>>, vector<1x128xf32>
    %82 = vector.broadcast %81 : vector<1x128xf32> to vector<32x128xf32>
    %83 = arith.addf %80, %82 : vector<32x128xf32>
    %cst_33 = arith.constant 5.000000e-01 : f32
    %84 = vector.broadcast %cst_33 : f32 to vector<32x128xf32>
    %85 = arith.mulf %84, %83 : vector<32x128xf32>
    %cst_34 = arith.constant 0.707106769 : f32
    %86 = vector.broadcast %cst_34 : f32 to vector<32x128xf32>
    %87 = arith.mulf %83, %86 : vector<32x128xf32>
    %88 = math.absf %87 : vector<32x128xf32>
    %cst_35 = arith.constant 0.327591091 : f32
    %89 = vector.broadcast %cst_35 : f32 to vector<32x128xf32>
    %90 = arith.mulf %89, %88 : vector<32x128xf32>
    %cst_36 = arith.constant 1.000000e+00 : f32
    %91 = vector.broadcast %cst_36 : f32 to vector<32x128xf32>
    %92 = arith.addf %91, %90 : vector<32x128xf32>
    %cst_37 = arith.constant 1.000000e+00 : f32
    %93 = vector.broadcast %cst_37 : f32 to vector<32x128xf32>
    %94 = arith.divf %93, %92 : vector<32x128xf32>
    %cst_38 = arith.constant 1.06140542 : f32
    %95 = vector.broadcast %cst_38 : f32 to vector<32x128xf32>
    %96 = arith.mulf %94, %95 : vector<32x128xf32>
    %cst_39 = arith.constant -1.45315206 : f32
    %97 = vector.broadcast %cst_39 : f32 to vector<32x128xf32>
    %98 = arith.addf %97, %96 : vector<32x128xf32>
    %99 = arith.mulf %94, %98 : vector<32x128xf32>
    %cst_40 = arith.constant 1.42141378 : f32
    %100 = vector.broadcast %cst_40 : f32 to vector<32x128xf32>
    %101 = arith.addf %100, %99 : vector<32x128xf32>
    %102 = arith.mulf %94, %101 : vector<32x128xf32>
    %cst_41 = arith.constant -0.284496725 : f32
    %103 = vector.broadcast %cst_41 : f32 to vector<32x128xf32>
    %104 = arith.addf %103, %102 : vector<32x128xf32>
    %105 = arith.mulf %94, %104 : vector<32x128xf32>
    %cst_42 = arith.constant 0.254829586 : f32
    %106 = vector.broadcast %cst_42 : f32 to vector<32x128xf32>
    %107 = arith.addf %106, %105 : vector<32x128xf32>
    %108 = arith.mulf %94, %107 : vector<32x128xf32>
    %cst_43 = arith.constant 0.000000e+00 : f32
    %109 = vector.broadcast %cst_43 : f32 to vector<32x128xf32>
    %110 = arith.subf %109, %88 : vector<32x128xf32>
    %111 = arith.mulf %110, %88 : vector<32x128xf32>
    %112 = math.exp %111 : vector<32x128xf32>
    %113 = arith.mulf %108, %112 : vector<32x128xf32>
    %cst_44 = arith.constant 1.000000e+00 : f32
    %114 = vector.broadcast %cst_44 : f32 to vector<32x128xf32>
    %115 = arith.subf %114, %113 : vector<32x128xf32>
    %cst_45 = arith.constant 0.000000e+00 : f32
    %116 = vector.broadcast %cst_45 : f32 to vector<32x128xf32>
    %117 = arith.cmpf oge, %87, %116 : vector<32x128xf32>
    %cst_46 = arith.constant 0.000000e+00 : f32
    %118 = vector.broadcast %cst_46 : f32 to vector<32x128xf32>
    %119 = arith.subf %118, %115 : vector<32x128xf32>
    %120 = arith.select %117, %115, %119 : vector<32x128xi1>, vector<32x128xf32>
    %cst_47 = arith.constant 1.000000e+00 : f32
    %121 = vector.broadcast %cst_47 : f32 to vector<32x128xf32>
    %122 = arith.addf %121, %120 : vector<32x128xf32>
    %123 = arith.mulf %85, %122 : vector<32x128xf32>
    %c0_48 = arith.constant 0 : index
    %c0_49 = arith.constant 0 : index
    %124 = vector.load %arg9[%c0_48, %c0_49] : memref<32x128xf32, #tpu.memory_space<vmem>>, vector<32x128xf32>
    tpu.vector_store %arg9[%c0_48, %c0_49], %123 {strides = array<i32>} : memref<32x128xf32, #tpu.memory_space<vmem>>, vector<32x128xf32>,
    %c0_50 = arith.constant 0 : index
    %c0_51 = arith.constant 0 : index
    %125 = tpu.strided_load %arg9[%c0_50, %c0_51] {strides = array<i32: 2, 1>} : memref<32x128xf32, #tpu.memory_space<vmem>>, vector<16x128xf32>
    %c1 = arith.constant 1 : index
    %c0_52 = arith.constant 0 : index
    %126 = tpu.strided_load %arg9[%c1, %c0_52] {strides = array<i32: 2, 1>} : memref<32x128xf32, #tpu.memory_space<vmem>>, vector<16x128xf32>
    %127 = tpu.iota {dimensions = array<i32: 0>} : vector<16x1xi32>
    %c8_i32 = arith.constant 8 : i32
    %c0_i32_53 = arith.constant 0 : i32
    %128 = arith.cmpi eq, %c8_i32, %c0_i32_53 : i32
    %c1_i32_54 = arith.constant 1 : i32
    %129 = arith.select %128, %c1_i32_54, %c8_i32 : i32
    %130 = vector.broadcast %129 : i32 to vector<16x1xi32>
    %131 = arith.remsi %127, %130 : vector<16x1xi32>
    %c0_i32_55 = arith.constant 0 : i32
    %132 = vector.broadcast %c0_i32_55 : i32 to vector<16x1xi32>
    %133 = arith.cmpi ne, %131, %132 : vector<16x1xi32>
    %c0_i32_56 = arith.constant 0 : i32
    %134 = vector.broadcast %c0_i32_56 : i32 to vector<16x1xi32>
    %135 = arith.cmpi slt, %131, %134 : vector<16x1xi32>
    %c0_i32_57 = arith.constant 0 : i32
    %136 = arith.cmpi slt, %129, %c0_i32_57 : i32
    %137 = vector.broadcast %136 : i1 to vector<16x1xi1>
    %138 = vector.broadcast %137 : vector<16x1xi1> to vector<16x1xi1>
    %139 = arith.xori %135, %138 : vector<16x1xi1>
    %140 = arith.andi %139, %133 : vector<16x1xi1>
    %141 = vector.broadcast %129 : i32 to vector<16x1xi32>
    %142 = arith.addi %131, %141 : vector<16x1xi32>
    %143 = arith.select %140, %142, %131 : vector<16x1xi1>, vector<16x1xi32>
    %c1_i32_58 = arith.constant 1 : i32
    %144 = vector.broadcast %c1_i32_58 : i32 to vector<16x1xi32>
    %145 = arith.cmpi sge, %143, %144 : vector<16x1xi32>
    %c1_i32_59 = arith.constant 1 : i32
    %146 = tpu.dynamic_rotate %126 by %c1_i32_59 dim 0 : vector<16x128xf32>, i32 -> vector<16x128xf32>
    %cst_60 = arith.constant 0.000000e+00 : f32
    %147 = vector.shape_cast %145 : vector<16x1xi1> to vector<16x1xi1>
    %148 = vector.broadcast %147 : vector<16x1xi1> to vector<16x128xi1>
    %149 = vector.broadcast %cst_60 : f32 to vector<16x128xf32>
    %150 = arith.select %148, %146, %149 : vector<16x128xi1>, vector<16x128xf32>
    %c2_i32 = arith.constant 2 : i32
    %151 = vector.broadcast %c2_i32 : i32 to vector<16x1xi32>
    %152 = arith.muli %151, %143 : vector<16x1xi32>
    %c2_i32_61 = arith.constant 2 : i32
    %153 = vector.broadcast %c2_i32_61 : i32 to vector<16x1xi32>
    %154 = arith.addi %152, %153 : vector<16x1xi32>
    %c15_i32 = arith.constant 15 : i32
    %155 = vector.broadcast %c15_i32 : i32 to vector<16x1xi32>
    %156 = arith.cmpi sle, %154, %155 : vector<16x1xi32>
    %c15_i32_62 = arith.constant 15 : i32
    %157 = tpu.dynamic_rotate %125 by %c15_i32_62 dim 0 : vector<16x128xf32>, i32 -> vector<16x128xf32>
    %cst_63 = arith.constant 0.000000e+00 : f32
    %158 = vector.shape_cast %156 : vector<16x1xi1> to vector<16x1xi1>
    %159 = vector.broadcast %158 : vector<16x1xi1> to vector<16x128xi1>
    %160 = vector.broadcast %cst_63 : f32 to vector<16x128xf32>
    %161 = arith.select %159, %157, %160 : vector<16x128xi1>, vector<16x128xf32>
    %162 = tpu.concatenate %150, %125, %126, %161 in 1 : vector<16x128xf32>, vector<16x128xf32>, vector<16x128xf32>, vector<16x128xf32> -> vector<16x512xf32>
    %c0_64 = arith.constant 0 : index
    %c0_65 = arith.constant 0 : index
    %163 = vector.load %arg6[%c0_64, %c0_65] : memref<512x64xf32, #tpu.memory_space<vmem>>, vector<512x64xf32>
    %cst_66 = arith.constant dense<0.000000e+00> : vector<16x64xf32>
    %164 = tpu.matmul %162, %163, %cst_66 {dimension_numbers = #tpu.dot_dimension_numbers<[1], [0], [0], [1], [0, 0, 1, 1], [], []>} : vector<16x512xf32>, vector<512x64xf32>, vector<16x64xf32> -> vector<16x64xf32>
    %c0_67 = arith.constant 0 : index
    %c0_68 = arith.constant 0 : index
    %165 = vector.load %arg7[%c0_67, %c0_68] : memref<1x64xf32, #tpu.memory_space<vmem>>, vector<1x64xf32>
    %166 = vector.broadcast %165 : vector<1x64xf32> to vector<16x64xf32>
    %167 = arith.addf %164, %166 : vector<16x64xf32>
    %cst_69 = arith.constant 5.000000e-01 : f32
    %168 = vector.broadcast %cst_69 : f32 to vector<16x64xf32>
    %169 = arith.mulf %168, %167 : vector<16x64xf32>
    %cst_70 = arith.constant 0.707106769 : f32
    %170 = vector.broadcast %cst_70 : f32 to vector<16x64xf32>
    %171 = arith.mulf %167, %170 : vector<16x64xf32>
    %172 = math.absf %171 : vector<16x64xf32>
    %cst_71 = arith.constant 0.327591091 : f32
    %173 = vector.broadcast %cst_71 : f32 to vector<16x64xf32>
    %174 = arith.mulf %173, %172 : vector<16x64xf32>
    %cst_72 = arith.constant 1.000000e+00 : f32
    %175 = vector.broadcast %cst_72 : f32 to vector<16x64xf32>
    %176 = arith.addf %175, %174 : vector<16x64xf32>
    %cst_73 = arith.constant 1.000000e+00 : f32
    %177 = vector.broadcast %cst_73 : f32 to vector<16x64xf32>
    %178 = arith.divf %177, %176 : vector<16x64xf32>
    %cst_74 = arith.constant 1.06140542 : f32
    %179 = vector.broadcast %cst_74 : f32 to vector<16x64xf32>
    %180 = arith.mulf %178, %179 : vector<16x64xf32>
    %cst_75 = arith.constant -1.45315206 : f32
    %181 = vector.broadcast %cst_75 : f32 to vector<16x64xf32>
    %182 = arith.addf %181, %180 : vector<16x64xf32>
    %183 = arith.mulf %178, %182 : vector<16x64xf32>
    %cst_76 = arith.constant 1.42141378 : f32
    %184 = vector.broadcast %cst_76 : f32 to vector<16x64xf32>
    %185 = arith.addf %184, %183 : vector<16x64xf32>
    %186 = arith.mulf %178, %185 : vector<16x64xf32>
    %cst_77 = arith.constant -0.284496725 : f32
    %187 = vector.broadcast %cst_77 : f32 to vector<16x64xf32>
    %188 = arith.addf %187, %186 : vector<16x64xf32>
    %189 = arith.mulf %178, %188 : vector<16x64xf32>
    %cst_78 = arith.constant 0.254829586 : f32
    %190 = vector.broadcast %cst_78 : f32 to vector<16x64xf32>
    %191 = arith.addf %190, %189 : vector<16x64xf32>
    %192 = arith.mulf %178, %191 : vector<16x64xf32>
    %cst_79 = arith.constant 0.000000e+00 : f32
    %193 = vector.broadcast %cst_79 : f32 to vector<16x64xf32>
    %194 = arith.subf %193, %172 : vector<16x64xf32>
    %195 = arith.mulf %194, %172 : vector<16x64xf32>
    %196 = math.exp %195 : vector<16x64xf32>
    %197 = arith.mulf %192, %196 : vector<16x64xf32>
    %cst_80 = arith.constant 1.000000e+00 : f32
    %198 = vector.broadcast %cst_80 : f32 to vector<16x64xf32>
    %199 = arith.subf %198, %197 : vector<16x64xf32>
    %cst_81 = arith.constant 0.000000e+00 : f32
    %200 = vector.broadcast %cst_81 : f32 to vector<16x64xf32>
    %201 = arith.cmpf oge, %171, %200 : vector<16x64xf32>
    %cst_82 = arith.constant 0.000000e+00 : f32
    %202 = vector.broadcast %cst_82 : f32 to vector<16x64xf32>
    %203 = arith.subf %202, %199 : vector<16x64xf32>
    %204 = arith.select %201, %199, %203 : vector<16x64xi1>, vector<16x64xf32>
    %cst_83 = arith.constant 1.000000e+00 : f32
    %205 = vector.broadcast %cst_83 : f32 to vector<16x64xf32>
    %206 = arith.addf %205, %204 : vector<16x64xf32>
    %207 = arith.mulf %169, %206 : vector<16x64xf32>
    %c0_84 = arith.constant 0 : index
    %c0_85 = arith.constant 0 : index
    %208 = vector.load %arg10[%c0_84, %c0_85] : memref<16x64xf32, #tpu.memory_space<vmem>>, vector<16x64xf32>
    tpu.vector_store %arg10[%c0_84, %c0_85], %207 {strides = array<i32>} : memref<16x64xf32, #tpu.memory_space<vmem>>, vector<16x64xf32>,
    %c0_86 = arith.constant 0 : index
    %c0_87 = arith.constant 0 : index
    %209 = tpu.strided_load %arg10[%c0_86, %c0_87] {strides = array<i32: 2, 1>} : memref<16x64xf32, #tpu.memory_space<vmem>>, vector<8x64xf32>
    %c1_88 = arith.constant 1 : index
    %c0_89 = arith.constant 0 : index
    %210 = tpu.strided_load %arg10[%c1_88, %c0_89] {strides = array<i32: 2, 1>} : memref<16x64xf32, #tpu.memory_space<vmem>>, vector<8x64xf32>
    %211 = tpu.concatenate %209, %210 in 1 : vector<8x64xf32>, vector<8x64xf32> -> vector<8x128xf32>
    %c0_90 = arith.constant 0 : index
    %c0_91 = arith.constant 0 : index
    %c0_92 = arith.constant 0 : index
    %212 = vector.load %arg8[%c0_90, %c0_91, %c0_92] : memref<1x8x128xf32, #tpu.memory_space<vmem>>, vector<1x8x128xf32>
    %213 = vector.shape_cast %212 : vector<1x8x128xf32> to vector<8x128xf32>
    %214 = vector.shape_cast %211 : vector<8x128xf32> to vector<1x8x128xf32>
    tpu.vector_store %arg8[%c0_90, %c0_91, %c0_92], %214 {strides = array<i32>} : memref<1x8x128xf32, #tpu.memory_space<vmem>>, vector<1x8x128xf32>,
    return
  }
  func.func @transform_0(%arg0: i32) -> (i32, i32, i32) {
    %c0_i32 = arith.constant 0 : i32
    %c0_i32_0 = arith.constant 0 : i32
    %c0_i32_1 = arith.constant 0 : i32
    return %arg0, %c0_i32, %c0_i32_0 : i32, i32, i32
  }
  func.func @transform_1(%arg0: i32) -> (i32, i32) {
    %c0_i32 = arith.constant 0 : i32
    %c0_i32_0 = arith.constant 0 : i32
    %c0_i32_1 = arith.constant 0 : i32
    return %c0_i32, %c0_i32_0 : i32, i32
  }
  func.func @transform_2(%arg0: i32) -> (i32, i32) {
    %c0_i32 = arith.constant 0 : i32
    %c0_i32_0 = arith.constant 0 : i32
    %c0_i32_1 = arith.constant 0 : i32
    return %c0_i32, %c0_i32_0 : i32, i32
  }
  func.func @transform_3(%arg0: i32) -> (i32, i32) {
    %c0_i32 = arith.constant 0 : i32
    %c0_i32_0 = arith.constant 0 : i32
    %c0_i32_1 = arith.constant 0 : i32
    return %c0_i32, %c0_i32_0 : i32, i32
  }
  func.func @transform_4(%arg0: i32) -> (i32, i32) {
    %c0_i32 = arith.constant 0 : i32
    %c0_i32_0 = arith.constant 0 : i32
    %c0_i32_1 = arith.constant 0 : i32
    return %c0_i32, %c0_i32_0 : i32, i32
  }
  func.func @transform_5(%arg0: i32) -> (i32, i32) {
    %c0_i32 = arith.constant 0 : i32
    %c0_i32_0 = arith.constant 0 : i32
    %c0_i32_1 = arith.constant 0 : i32
    return %c0_i32, %c0_i32_0 : i32, i32
  }
  func.func @transform_6(%arg0: i32) -> (i32, i32) {
    %c0_i32 = arith.constant 0 : i32
    %c0_i32_0 = arith.constant 0 : i32
    %c0_i32_1 = arith.constant 0 : i32
    return %c0_i32, %c0_i32_0 : i32, i32
  }
  func.func @transform_7(%arg0: i32) -> (i32, i32, i32) {
    %c0_i32 = arith.constant 0 : i32
    %c0_i32_0 = arith.constant 0 : i32
    %c0_i32_1 = arith.constant 0 : i32
    return %arg0, %c0_i32, %c0_i32_0 : i32, i32, i32
  }
}

</mosaic_0001>

<llo_original>
// kernel: tile.18
$region0: #{tile.18}
  #allocation0 [shape = 's32[1]{0}', space=sflag, size = 0x4, scoped, tag = 'scoped memory for tile.18']
  %s0 = inlined_call_operand.vmem [shape: f32[8], index: 0, kind: input, shape index: {}]
  %s1 = inlined_call_operand.vmem [shape: f32[16,8], index: 1, kind: output, shape index: {}]
  // Predicated region
  $region2: #{tile.18} parent=0 // pred_check
    _
  $region3: #{tile.18} parent=0 // pred_check_branch
    %3 = sbr.rel (0) target = $region5
  $region4: #{tile.18} parent=0 // pred_region
    _
  $region5: #{tile.18} parent=0 // pred_fallthru
    _
  %v4 = vld [vmem:[%s0] ss:$0 sm:$0xff]
  %5 = vst [vmem:[%s1] sm:$0xff] %v4
  %s6 = scalar_lea.vmem %s1, 8
  %7 = vst [vmem:[%s6] sm:$0xff] %v4

// kernel: tile.19
$region0: #{tile.19}
  %s0 = inlined_call_operand.vmem [shape: f32[16,8], index: 0, kind: input, shape index: {}]
  %s1 = inlined_call_operand.vmem [shape: f32[1,128], index: 1, kind: output, shape index: {}]
  $region1: #{tile.19} parent=0
    #allocation0 [shape = 'u8[4096]{0}', space=vmem, size = 0x1000, scoped, tag = 'scoped mem for output reshape']
    %v2 = vld [vmem:[%s0] sm:$0x1]
    %vm3 = vcmask 64512
    %4 = vst.msk [vmem:[#allocation0] sm:$0x1] %vm3, %v2
    %s5 = scalar_lea.vmem %s0, 15
    %v6 = vld [vmem:[%s5] sm:$0x1]
    %7 = vrot.lane.b32.xlu0 %v6, 120
    %v8 = vpop.permute.xlu0 %7
    %vm9 = vcmask 1048512
    %10 = vst.msk [vmem:[#allocation0] sm:$0x1] %vm9, %v8
    %s11 = scalar_lea.vmem %s0, 14
    %v12 = vld [vmem:[%s11] sm:$0x1]
    %13 = vrot.lane.b32.xlu0 %v12, 112
    %v14 = vpop.permute.xlu0 %13
    %vm15 = vcmask 982912
    %16 = vst.msk [vmem:[#allocation0] sm:$0x1] %vm15, %v14
    %s17 = scalar_lea.vmem %s0, 13
    %v18 = vld [vmem:[%s17] sm:$0x1]
    %19 = vrot.lane.b32.xlu0 %v18, 104
    %v20 = vpop.permute.xlu0 %19
    %vm21 = vcmask 917312
    %22 = vst.msk [vmem:[#allocation0] sm:$0x1] %vm21, %v20
    %s23 = scalar_lea.vmem %s0, 12
    %v24 = vld [vmem:[%s23] sm:$0x1]
    %25 = vrot.lane.b32.xlu0 %v24, 96
    %v26 = vpop.permute.xlu0 %25
    %vm27 = vcmask 851712
    %28 = vst.msk [vmem:[#allocation0] sm:$0x1] %vm27, %v26
    %s29 = scalar_lea.vmem %s0, 11
    %v30 = vld [vmem:[%s29] sm:$0x1]
    %31 = vrot.lane.b32.xlu0 %v30, 88
    %v32 = vpop.permute.xlu0 %31
    %vm33 = vcmask 786112
    %34 = vst.msk [vmem:[#allocation0] sm:$0x1] %vm33, %v32
    %s35 = scalar_lea.vmem %s0, 10
    %v36 = vld [vmem:[%s35] sm:$0x1]
    %37 = vrot.lane.b32.xlu0 %v36, 80
    %v38 = vpop.permute.xlu0 %37
    %vm39 = vcmask 720512
    %40 = vst.msk [vmem:[#allocation0] sm:$0x1] %vm39, %v38
    %s41 = scalar_lea.vmem %s0, 9
    %v42 = vld [vmem:[%s41] sm:$0x1]
    %43 = vrot.lane.b32.xlu0 %v42, 72
    %v44 = vpop.permute.xlu0 %43
    %vm45 = vcmask 654912
    %46 = vst.msk [vmem:[#allocation0] sm:$0x1] %vm45, %v44
    %s47 = scalar_lea.vmem %s0, 8
    %v48 = vld [vmem:[%s47] sm:$0x1]
    %49 = vrot.lane.b32.xlu0 %v48, 64
    %v50 = vpop.permute.xlu0 %49
    %vm51 = vcmask 589312
    %52 = vst.msk [vmem:[#allocation0] sm:$0x1] %vm51, %v50
    %s53 = scalar_lea.vmem %s0, 7
    %v54 = vld [vmem:[%s53] sm:$0x1]
    %55 = vrot.lane.b32.xlu0 %v54, 56
    %v56 = vpop.permute.xlu0 %55
    %vm57 = vcmask 523712
    %58 = vst.msk [vmem:[#allocation0] sm:$0x1] %vm57, %v56
    %s59 = scalar_lea.vmem %s0, 6
    %v60 = vld [vmem:[%s59] sm:$0x1]
    %61 = vrot.lane.b32.xlu0 %v60, 48
    %v62 = vpop.permute.xlu0 %61
    %vm63 = vcmask 458112
    %64 = vst.msk [vmem:[#allocation0] sm:$0x1] %vm63, %v62
    %s65 = scalar_lea.vmem %s0, 5
    %v66 = vld [vmem:[%s65] sm:$0x1]
    %67 = vrot.lane.b32.xlu0 %v66, 40
    %v68 = vpop.permute.xlu0 %67
    %vm69 = vcmask 392512
    %70 = vst.msk [vmem:[#allocation0] sm:$0x1] %vm69, %v68
    %s71 = scalar_lea.vmem %s0, 4
    %v72 = vld [vmem:[%s71] sm:$0x1]
    %73 = vrot.lane.b32.xlu0 %v72, 32
    %v74 = vpop.permute.xlu0 %73
    %vm75 = vcmask 326912
    %76 = vst.msk [vmem:[#allocation0] sm:$0x1] %vm75, %v74
    %s77 = scalar_lea.vmem %s0, 3
    %v78 = vld [vmem:[%s77] sm:$0x1]
    %79 = vrot.lane.b32.xlu0 %v78, 24
    %v80 = vpop.permute.xlu0 %79
    %vm81 = vcmask 261312
    %82 = vst.msk [vmem:[#allocation0] sm:$0x1] %vm81, %v80
    %s83 = scalar_lea.vmem %s0, 2
    %v84 = vld [vmem:[%s83] sm:$0x1]
    %85 = vrot.lane.b32.xlu0 %v84, 16
    %v86 = vpop.permute.xlu0 %85
    %vm87 = vcmask 195712
    %88 = vst.msk [vmem:[#allocation0] sm:$0x1] %vm87, %v86
    %s89 = scalar_lea.vmem %s0, 1
    %v90 = vld [vmem:[%s89] sm:$0x1]
    %91 = vrot.lane.b32.xlu0 %v90, 8
    %v92 = vpop.permute.xlu0 %91
    %vm93 = vcmask 130112
    %94 = vst.msk [vmem:[#allocation0] sm:$0x1] %vm93, %v92
    %s96 = sshllo.u32 0, 1
    %v98 = vld [vmem:[#allocation0] sm:%s96]
    %s99 = sshllo.u32 0, 1
    %100 = vst [vmem:[%s1] sm:%s99] %v98

// kernel: tile.28
$region0: #{tile.28}
  #allocation0 [shape = 's32[1]{0}', space=sflag, size = 0x4, scoped, tag = 'scoped memory for tile.28']
  %s0 = inlined_call_operand.vmem [shape: f32[8], index: 0, kind: input, shape index: {}]
  %s1 = inlined_call_operand.vmem [shape: f32[8,8], index: 1, kind: output, shape index: {}]
  // Predicated region
  $region2: #{tile.28} parent=0 // pred_check
    _
  $region3: #{tile.28} parent=0 // pred_check_branch
    %3 = sbr.rel (0) target = $region5
  $region4: #{tile.28} parent=0 // pred_region
    _
  $region5: #{tile.28} parent=0 // pred_fallthru
    _
  %v4 = vld [vmem:[%s0] ss:$0 sm:$0xff]
  %5 = vst [vmem:[%s1] sm:$0xff] %v4

// kernel: tile.29
$region0: #{tile.29}
  %s0 = inlined_call_operand.vmem [shape: f32[8,8], index: 0, kind: input, shape index: {}]
  %s1 = inlined_call_operand.vmem [shape: f32[1,64], index: 1, kind: output, shape index: {}]
  $region1: #{tile.29} parent=0
    #allocation0 [shape = 'u8[4096]{0}', space=vmem, size = 0x1000, scoped, tag = 'scoped mem for output reshape']
    %v2 = vld [vmem:[%s0] sm:$0x1]
    %vm3 = vcmask 64512
    %4 = vst.msk [vmem:[#allocation0] sm:$0x1] %vm3, %v2
    %s5 = scalar_lea.vmem %s0, 7
    %v6 = vld [vmem:[%s5] sm:$0x1]
    %7 = vrot.lane.b32.xlu0 %v6, 56
    %v8 = vpop.permute.xlu0 %7
    %vm9 = vcmask 523712
    %10 = vst.msk [vmem:[#allocation0] sm:$0x1] %vm9, %v8
    %s11 = scalar_lea.vmem %s0, 6
    %v12 = vld [vmem:[%s11] sm:$0x1]
    %13 = vrot.lane.b32.xlu0 %v12, 48
    %v14 = vpop.permute.xlu0 %13
    %vm15 = vcmask 458112
    %16 = vst.msk [vmem:[#allocation0] sm:$0x1] %vm15, %v14
    %s17 = scalar_lea.vmem %s0, 5
    %v18 = vld [vmem:[%s17] sm:$0x1]
    %19 = vrot.lane.b32.xlu0 %v18, 40
    %v20 = vpop.permute.xlu0 %19
    %vm21 = vcmask 392512
    %22 = vst.msk [vmem:[#allocation0] sm:$0x1] %vm21, %v20
    %s23 = scalar_lea.vmem %s0, 4
    %v24 = vld [vmem:[%s23] sm:$0x1]
    %25 = vrot.lane.b32.xlu0 %v24, 32
    %v26 = vpop.permute.xlu0 %25
    %vm27 = vcmask 326912
    %28 = vst.msk [vmem:[#allocation0] sm:$0x1] %vm27, %v26
    %s29 = scalar_lea.vmem %s0, 3
    %v30 = vld [vmem:[%s29] sm:$0x1]
    %31 = vrot.lane.b32.xlu0 %v30, 24
    %v32 = vpop.permute.xlu0 %31
    %vm33 = vcmask 261312
    %34 = vst.msk [vmem:[#allocation0] sm:$0x1] %vm33, %v32
    %s35 = scalar_lea.vmem %s0, 2
    %v36 = vld [vmem:[%s35] sm:$0x1]
    %37 = vrot.lane.b32.xlu0 %v36, 16
    %v38 = vpop.permute.xlu0 %37
    %vm39 = vcmask 195712
    %40 = vst.msk [vmem:[#allocation0] sm:$0x1] %vm39, %v38
    %s41 = scalar_lea.vmem %s0, 1
    %v42 = vld [vmem:[%s41] sm:$0x1]
    %43 = vrot.lane.b32.xlu0 %v42, 8
    %v44 = vpop.permute.xlu0 %43
    %vm45 = vcmask 130112
    %46 = vst.msk [vmem:[#allocation0] sm:$0x1] %vm45, %v44
    %s48 = sshllo.u32 0, 1
    %v50 = vld [vmem:[#allocation0] sm:%s48]
    %s51 = sshllo.u32 0, 1
    %52 = vst [vmem:[%s1] sm:%s51] %v50

// kernel: aggregation_block_forward.1
$region0: #{aggregation_block_forward.1}
  #allocation0 [shape = 'u32[]', space=smem, size = 0x4, offset = 0x4, fixed_abs, tag = 'smem constant byte address 0x4 - core index']
  #allocation1 [shape = 'u32[144,128]{1,0:T(1,128)}', space=vmem, size = 0x12000, scoped, tag = 'internal scratch']
  #allocation2 [shape = 'f32[32,128]{1,0:T(8,128)}', space=vmem, size = 0x4000, scoped, tag = 'scratch operand']
  #allocation3 [shape = 'f32[16,64]{1,0:T(8,128)}', space=vmem, size = 0x2000, scoped, tag = 'scratch operand']
  %s0 = inlined_call_operand.vmem [shape: f32[1,32,64], index: 0, kind: input, shape index: {}]
  %s1 = inlined_call_operand.vmem [shape: f32[64,128], index: 1, kind: input, shape index: {}]
  %s2 = inlined_call_operand.vmem [shape: f32[1,128], index: 2, kind: input, shape index: {}]
  %s3 = inlined_call_operand.vmem [shape: f32[384,128], index: 3, kind: input, shape index: {}]
  %s4 = inlined_call_operand.vmem [shape: f32[1,128], index: 4, kind: input, shape index: {}]
  %s5 = inlined_call_operand.vmem [shape: f32[512,64], index: 5, kind: input, shape index: {}]
  %s6 = inlined_call_operand.vmem [shape: f32[1,64], index: 6, kind: input, shape index: {}]
  %s7 = inlined_call_operand.vmem [shape: f32[1,8,128], index: 7, kind: output, shape index: {}]
  %s8 = sld [smem:[#allocation0]]
  $region38: #{aggregation_block_forward.1} parent=0
    _
  %s10 = ssub.s32 1, %s8
  %s11 = scalar_select 0, %s10, %s8
  // Predicated region
  $region2: #{aggregation_block_forward.1} parent=0 // pred_check
    _
  $region3: #{aggregation_block_forward.1} parent=0 // pred_check_branch
    %13 = sbr.rel (0) target = $region5
  $region4: #{aggregation_block_forward.1} parent=0 // pred_region
    _
  $region5: #{aggregation_block_forward.1} parent=0 // pred_fallthru
    _
  // Predicated region
  $region6: #{aggregation_block_forward.1} parent=0 // pred_check
    _
  $region7: #{aggregation_block_forward.1} parent=0 // pred_check_branch
    %15 = sbr.rel (0) target = $region9
  $region8: #{aggregation_block_forward.1} parent=0 // pred_region
    _
  $region9: #{aggregation_block_forward.1} parent=0 // pred_fallthru
    _
  // Predicated region
  $region10: #{aggregation_block_forward.1} parent=0 // pred_check
    _
  $region11: #{aggregation_block_forward.1} parent=0 // pred_check_branch
    %17 = sbr.rel (0) target = $region13
  $region12: #{aggregation_block_forward.1} parent=0 // pred_region
    _
  $region13: #{aggregation_block_forward.1} parent=0 // pred_fallthru
    _
  // Predicated region
  $region14: #{aggregation_block_forward.1} parent=0 // pred_check
    _
  $region15: #{aggregation_block_forward.1} parent=0 // pred_check_branch
    %19 = sbr.rel (0) target = $region17
  $region16: #{aggregation_block_forward.1} parent=0 // pred_region
    _
  $region17: #{aggregation_block_forward.1} parent=0 // pred_fallthru
    _
  // Predicated region
  $region18: #{aggregation_block_forward.1} parent=0 // pred_check
    _
  $region19: #{aggregation_block_forward.1} parent=0 // pred_check_branch
    %21 = sbr.rel (0) target = $region21
  $region20: #{aggregation_block_forward.1} parent=0 // pred_region
    _
  $region21: #{aggregation_block_forward.1} parent=0 // pred_fallthru
    _
  // Predicated region
  $region22: #{aggregation_block_forward.1} parent=0 // pred_check
    _
  $region23: #{aggregation_block_forward.1} parent=0 // pred_check_branch
    %23 = sbr.rel (0) target = $region25
  $region24: #{aggregation_block_forward.1} parent=0 // pred_region
    _
  $region25: #{aggregation_block_forward.1} parent=0 // pred_fallthru
    _
  // Predicated region
  $region26: #{aggregation_block_forward.1} parent=0 // pred_check
    _
  $region27: #{aggregation_block_forward.1} parent=0 // pred_check_branch
    %25 = sbr.rel (0) target = $region29
  $region28: #{aggregation_block_forward.1} parent=0 // pred_region
    _
  $region29: #{aggregation_block_forward.1} parent=0 // pred_fallthru
    _
  %v26 = vld [vmem:[%s0] sm:$0xff]
  %v27 = vld [vmem:[%s0 + $0x8] sm:$0xff]
  %v28 = vld [vmem:[%s0 + $0x10] sm:$0xff]
  %v29 = vld [vmem:[%s0 + $0x18] sm:$0xff]
  %v30 = vld [vmem:[%s1] sm:$0xff]
  %v31 = vld [vmem:[%s1 + $0x8] sm:$0xff]
  %v32 = vld [vmem:[%s1 + $0x10] sm:$0xff]
  %v33 = vld [vmem:[%s1 + $0x18] sm:$0xff]
  %v34 = vld [vmem:[%s1 + $0x20] sm:$0xff]
  %v35 = vld [vmem:[%s1 + $0x28] sm:$0xff]
  %v36 = vld [vmem:[%s1 + $0x30] sm:$0xff]
  %v37 = vld [vmem:[%s1 + $0x38] sm:$0xff]
  %v38 = vld [vmem:[%s2] sm:$0x1]
  %v40 = vlaneseq
  %v41 = vshrl.u32 %v40, 7
  %v42 = vsub.s32 0, %v41
  %v43 = vrot.slane %v38, %v42
  %vm45 = vcmask 523264
  %v47 = vsel %vm45, %v26, 0
  %v50 = vsel %vm45, %v27, 0
  %v53 = vsel %vm45, %v28, 0
  %v56 = vsel %vm45, %v29, 0
  %58 = vmatprep.subr.mxu0 0.0
  %59 = vmatpush1.msra.mxu0 %v30
  %60 = vmatprep.subr.mxu0 0.0
  %61 = vmatpush1.msra.mxu0 %v31
  %62 = vmatprep.subr.mxu0 0.0
  %63 = vmatpush1.msra.mxu0 %v32
  %64 = vmatprep.subr.mxu0 0.0
  %65 = vmatpush1.msra.mxu0 %v33
  %66 = vmatprep.subr.mxu0 0.0
  %67 = vmatpush1.msra.mxu0 %v34
  %68 = vmatprep.subr.mxu0 0.0
  %69 = vmatpush1.msra.mxu0 %v35
  %70 = vmatprep.subr.mxu0 0.0
  %71 = vmatpush1.msra.mxu0 %v36
  %72 = vmatprep.subr.mxu0 0.0
  %73 = vmatpush1.msra.mxu0 %v37
  %74 = vmatprep.subr.mxu0 0.0
  %75 = vmatpush1.msra.mxu0 0.0
  %76 = vmatprep.subr.mxu0 0.0
  %77 = vmatpush1.msra.mxu0 0.0
  %78 = vmatprep.subr.mxu0 0.0
  %79 = vmatpush1.msra.mxu0 0.0
  %80 = vmatprep.subr.mxu0 0.0
  %81 = vmatpush1.msra.mxu0 0.0
  %82 = vmatprep.subr.mxu0 0.0
  %83 = vmatpush1.msra.mxu0 0.0
  %84 = vmatprep.subr.mxu0 0.0
  %85 = vmatpush1.msra.mxu0 0.0
  %86 = vmatprep.subr.mxu0 0.0
  %87 = vmatpush1.msra.mxu0 0.0
  %88 = vmatprep.subr.mxu0 0.0
  %89 = vmatpush1.msra.mxu0 0.0
  %90 = vmatprep.subr.mxu0 0.0
  %91 = vmatpush1.msra.mxu0 0.0
  %92 = vmatprep.subr.mxu0 0.0
  %93 = vmatpush1.msra.mxu0 0.0
  %94 = vmatprep.subr.mxu0 0.0
  %95 = vmatpush1.msra.mxu0 0.0
  %96 = vmatprep.subr.mxu0 0.0
  %97 = vmatpush1.msra.mxu0 0.0
  %98 = vmatprep.subr.mxu0 0.0
  %99 = vmatpush1.msra.mxu0 0.0
  %100 = vmatprep.subr.mxu0 0.0
  %101 = vmatpush1.msra.mxu0 0.0
  %102 = vmatprep.subr.mxu0 0.0
  %103 = vmatpush1.msra.mxu0 0.0
  %104 = vmatprep.subr.mxu0 0.0
  %105 = vmatpush1.msra.mxu0 0.0
  %106 = vmatprep.subr.mxu0 0.0
  %107 = vmatpush1.msra.mxu0 0.0
  %108 = vmatprep.subr.mxu0 0.0
  %109 = vmatpush1.msra.mxu0 0.0
  %110 = vmatprep.subr.mxu0 0.0
  %111 = vmatpush1.msra.mxu0 0.0
  %112 = vmatprep.subr.mxu0 0.0
  %113 = vmatpush1.msra.mxu0 0.0
  %114 = vmatprep.subr.mxu0 0.0
  %115 = vmatpush1.msra.mxu0 0.0
  %116 = vmatprep.subr.mxu0 0.0
  %117 = vmatpush1.msra.mxu0 0.0
  %118 = vmatprep.subr.mxu0 0.0
  %119 = vmatpush1.msra.mxu0 0.0
  %120 = vmatprep.subr.mxu0 0.0
  %121 = vmatpush1.msra.mxu0 0.0
  %122 = vmatprep.mubr.f32.mxu0 0.0
  %123 = vmatmul.mubr.f32.gmra.mrb[0].mxu0 %v47
  %v124 = vpop.f32.mrb[0].mxu0
  %v125 = vadd.f32 %v43, %v124
  %v126 = vpop.f32.mrb[0].mxu0
  %127 = vmatprep.mubr.f32.mxu0 0.0
  %128 = vmatmul.mubr.f32.gmra.mrb[0].mxu0 %v50
  %v129 = vpop.f32.mrb[0].mxu0
  %v130 = vadd.f32 %v43, %v129
  %v131 = vpop.f32.mrb[0].mxu0
  %132 = vmatprep.mubr.f32.mxu0 0.0
  %133 = vmatmul.mubr.f32.gmra.mrb[0].mxu0 %v53
  %v134 = vpop.f32.mrb[0].mxu0
  %v135 = vadd.f32 %v43, %v134
  %v136 = vpop.f32.mrb[0].mxu0
  %137 = vmatprep.mubr.f32.mxu0 0.0
  %138 = vmatmul.mubr.f32.gmra.mrb[0].mxu0 %v56
  %v139 = vpop.f32.mrb[0].mxu0
  %v140 = vadd.f32 %v43, %v139
  %v141 = vpop.f32.mrb[0].mxu0
  %142 = vdwg.mxu0
  %v143 = vmul.f32 %v125, 0.5
  %v144 = vmul.f32 %v130, 0.5
  %v145 = vmul.f32 %v135, 0.5
  %v146 = vmul.f32 %v140, 0.5
  %v147 = vmul.f32 %v125, 0.70710677
  %v148 = vmul.f32 %v130, 0.70710677
  %v149 = vmul.f32 %v135, 0.70710677
  %v150 = vmul.f32 %v140, 0.70710677
  %v151 = vand.u32 2147483647, %v147
  %v152 = vand.u32 2147483647, %v148
  %v153 = vand.u32 2147483647, %v149
  %v154 = vand.u32 2147483647, %v150
  %v155 = vmul.f32 %v151, 0.3275911
  %v156 = vmul.f32 %v152, 0.3275911
  %v157 = vmul.f32 %v153, 0.3275911
  %v158 = vmul.f32 %v154, 0.3275911
  %v159 = vadd.f32 %v155, 1.0
  %v160 = vadd.f32 %v156, 1.0
  %v161 = vadd.f32 %v157, 1.0
  %v162 = vadd.f32 %v158, 1.0
  %v163 = vrcp.pop %v159
  %v164 = vmul.f32 1.0, %v163
  %v165 = vrcp.pop %v160
  %v166 = vmul.f32 1.0, %v165
  %v167 = vrcp.pop %v161
  %v168 = vmul.f32 1.0, %v167
  %v169 = vrcp.pop %v162
  %v170 = vmul.f32 1.0, %v169
  %v171 = vmul.f32 %v164, 1.0614054
  %v172 = vmul.f32 %v166, 1.0614054
  %v173 = vmul.f32 %v168, 1.0614054
  %v174 = vmul.f32 %v170, 1.0614054
  %v175 = vadd.f32 %v171, -1.4531521
  %v176 = vadd.f32 %v172, -1.4531521
  %v177 = vadd.f32 %v173, -1.4531521
  %v178 = vadd.f32 %v174, -1.4531521
  %v179 = vmul.f32 %v164, %v175
  %v180 = vmul.f32 %v166, %v176
  %v181 = vmul.f32 %v168, %v177
  %v182 = vmul.f32 %v170, %v178
  %v183 = vadd.f32 %v179, 1.4214138
  %v184 = vadd.f32 %v180, 1.4214138
  %v185 = vadd.f32 %v181, 1.4214138
  %v186 = vadd.f32 %v182, 1.4214138
  %v187 = vmul.f32 %v164, %v183
  %v188 = vmul.f32 %v166, %v184
  %v189 = vmul.f32 %v168, %v185
  %v190 = vmul.f32 %v170, %v186
  %v191 = vadd.f32 %v187, -0.28449672
  %v192 = vadd.f32 %v188, -0.28449672
  %v193 = vadd.f32 %v189, -0.28449672
  %v194 = vadd.f32 %v190, -0.28449672
  %v195 = vmul.f32 %v164, %v191
  %v196 = vmul.f32 %v166, %v192
  %v197 = vmul.f32 %v168, %v193
  %v198 = vmul.f32 %v170, %v194
  %v199 = vadd.f32 %v195, 0.2548296
  %v200 = vadd.f32 %v196, 0.2548296
  %v201 = vadd.f32 %v197, 0.2548296
  %v202 = vadd.f32 %v198, 0.2548296
  %v203 = vmul.f32 %v164, %v199
  %v204 = vmul.f32 %v166, %v200
  %v205 = vmul.f32 %v168, %v201
  %v206 = vmul.f32 %v170, %v202
  %v207 = vsub.f32 0.0, %v151
  %v208 = vsub.f32 0.0, %v152
  %v209 = vsub.f32 0.0, %v153
  %v210 = vsub.f32 0.0, %v154
  %v211 = vmul.f32 %v207, %v151
  %v212 = vmul.f32 %v208, %v152
  %v213 = vmul.f32 %v209, %v153
  %v214 = vmul.f32 %v210, %v154
  %v215 = vmul.f32 %v211, 1.442695
  %v216 = vpow.pop %v215
  %v217 = vmul.f32 %v212, 1.442695
  %v218 = vpow.pop %v217
  %v219 = vmul.f32 %v213, 1.442695
  %v220 = vpow.pop %v219
  %v221 = vmul.f32 %v214, 1.442695
  %v222 = vpow.pop %v221
  %v223 = vmul.f32 %v203, %v216
  %v224 = vmul.f32 %v204, %v218
  %v225 = vmul.f32 %v205, %v220
  %v226 = vmul.f32 %v206, %v222
  %v227 = vsub.f32 1.0, %v223
  %v228 = vsub.f32 1.0, %v224
  %v229 = vsub.f32 1.0, %v225
  %v230 = vsub.f32 1.0, %v226
  %vm231 = vcmp.ge.f32.partialorder %v147, 0.0
  %vm232 = vcmp.ge.f32.partialorder %v148, 0.0
  %vm233 = vcmp.ge.f32.partialorder %v149, 0.0
  %vm234 = vcmp.ge.f32.partialorder %v150, 0.0
  %v235 = vsub.f32 0.0, %v227
  %v236 = vsub.f32 0.0, %v228
  %v237 = vsub.f32 0.0, %v229
  %v238 = vsub.f32 0.0, %v230
  %v239 = vsel %vm231, %v227, %v235
  %v240 = vsel %vm232, %v228, %v236
  %v241 = vsel %vm233, %v229, %v237
  %v242 = vsel %vm234, %v230, %v238
  %v243 = vadd.f32 %v239, 1.0
  %v244 = vadd.f32 %v240, 1.0
  %v245 = vadd.f32 %v241, 1.0
  %v246 = vadd.f32 %v242, 1.0
  %v247 = vmul.f32 %v143, %v243
  %v248 = vmul.f32 %v144, %v244
  %v249 = vmul.f32 %v145, %v245
  %v250 = vmul.f32 %v146, %v246
  %v251 = vlaneseq
  %v252 = vshrl.u32 %v251, 7
  %v253 = vadd.s32 %v252, 8
  %v254 = vadd.s32 %v252, 16
  %v255 = vadd.s32 %v252, 24
  %vm256 = vcmp.lt.s32.totalorder %v252, 0
  %v257 = vsub.s32 0, %v252
  %v258 = vsel %vm256, %v257, %v252
  %v259 = vshrl.u32 %v258, 4
  %v260 = vand.u32 %v258, 15
  %v261 = vsub.s32 0, %v260
  %v262 = vsel %vm256, %v261, %v260
  %vm263 = vcmp.lt.s32.totalorder %v253, 0
  %v264 = vsub.s32 0, %v253
  %v265 = vsel %vm263, %v264, %v253
  %v266 = vshrl.u32 %v265, 4
  %v267 = vand.u32 %v265, 15
  %v268 = vsub.s32 0, %v267
  %v269 = vsel %vm263, %v268, %v267
  %vm270 = vcmp.lt.s32.totalorder %v254, 0
  %v271 = vsub.s32 0, %v254
  %v272 = vsel %vm270, %v271, %v254
  %v273 = vshrl.u32 %v272, 4
  %v274 = vand.u32 %v272, 15
  %v275 = vsub.s32 0, %v274
  %v276 = vsel %vm270, %v275, %v274
  %vm277 = vcmp.lt.s32.totalorder %v255, 0
  %v278 = vsub.s32 0, %v255
  %v279 = vsel %vm277, %v278, %v255
  %v280 = vshrl.u32 %v279, 4
  %v281 = vand.u32 %v279, 15
  %v282 = vsub.s32 0, %v281
  %v283 = vsel %vm277, %v282, %v281
  %vm284 = vcmp.ne.s32.totalorder %v262, 0
  %vm285 = vcmp.ne.s32.totalorder %v269, 0
  %vm286 = vcmp.ne.s32.totalorder %v276, 0
  %vm287 = vcmp.ne.s32.totalorder %v283, 0
  %vm288 = vcmp.lt.s32.totalorder %v262, 0
  %vm289 = vcmp.lt.s32.totalorder %v269, 0
  %vm290 = vcmp.lt.s32.totalorder %v276, 0
  %vm291 = vcmp.lt.s32.totalorder %v283, 0
  %vm292 = vmand %vm288, %vm284
  %vm293 = vmand %vm289, %vm285
  %vm294 = vmand %vm290, %vm286
  %vm295 = vmand %vm291, %vm287
  %v296 = vadd.s32 %v262, 16
  %v297 = vadd.s32 %v269, 16
  %v298 = vadd.s32 %v276, 16
  %v299 = vadd.s32 %v283, 16
  %v300 = vsel %vm292, %v296, %v262
  %v301 = vsel %vm293, %v297, %v269
  %v302 = vsel %vm294, %v298, %v276
  %v303 = vsel %vm295, %v299, %v283
  %vm304 = vcmp.ge.s32.totalorder %v300, 1
  %vm305 = vcmp.ge.s32.totalorder %v301, 1
  %vm306 = vcmp.ge.s32.totalorder %v302, 1
  %vm307 = vcmp.ge.s32.totalorder %v303, 1
  %v308 = vrot.slane %v247, 7
  %v309 = vrot.slane %v248, 7
  %v310 = vrot.slane %v249, 7
  %v311 = vrot.slane %v250, 7
  %vm312 = vcmp.lt.s32.totalorder %v252, 1
  %v313 = vsel %vm312, %v310, %v311
  %v314 = vsel %vm312, %v309, %v310
  %v315 = vsel %vm312, %v308, %v309
  %v316 = vsel %vm312, %v311, %v308
  %v317 = vsel %vm304, 1, 0
  %v318 = vsel %vm305, 1, 0
  %v319 = vsel %vm306, 1, 0
  %v320 = vsel %vm307, 1, 0
  %vm321 = vcmp.eq.s32.totalorder %v317, 1
  %vm322 = vcmp.eq.s32.totalorder %v318, 1
  %vm323 = vcmp.eq.s32.totalorder %v319, 1
  %vm324 = vcmp.eq.s32.totalorder %v320, 1
  %v325 = vsel %vm321, %v316, 0.0
  %v326 = vsel %vm322, %v315, 0.0
  %v327 = vsel %vm323, %v314, 0.0
  %v328 = vsel %vm324, %v313, 0.0
  %vm329 = vcmp.le.s32.totalorder %v300, 14
  %vm330 = vcmp.le.s32.totalorder %v301, 14
  %vm331 = vcmp.le.s32.totalorder %v302, 14
  %vm332 = vcmp.le.s32.totalorder %v303, 14
  %v333 = vrot.slane %v247, 1
  %v334 = vrot.slane %v248, 1
  %v335 = vrot.slane %v249, 1
  %v336 = vrot.slane %v250, 1
  %vm337 = vcmp.lt.s32.totalorder %v252, 7
  %v338 = vsel %vm337, %v335, %v336
  %v339 = vsel %vm337, %v334, %v335
  %v340 = vsel %vm337, %v333, %v334
  %v341 = vsel %vm337, %v336, %v333
  %v342 = vsel %vm329, 1, 0
  %v343 = vsel %vm330, 1, 0
  %v344 = vsel %vm331, 1, 0
  %v345 = vsel %vm332, 1, 0
  %vm346 = vcmp.eq.s32.totalorder %v342, 1
  %vm347 = vcmp.eq.s32.totalorder %v343, 1
  %vm348 = vcmp.eq.s32.totalorder %v344, 1
  %vm349 = vcmp.eq.s32.totalorder %v345, 1
  %v350 = vsel %vm346, %v340, 0.0
  %v351 = vsel %vm347, %v339, 0.0
  %v352 = vsel %vm348, %v338, 0.0
  %v353 = vsel %vm349, %v341, 0.0
  %v354 = vld [vmem:[%s3] sm:$0xff]
  %v355 = vld [vmem:[%s3 + $0x8] sm:$0xff]
  %v356 = vld [vmem:[%s3 + $0x10] sm:$0xff]
  %v357 = vld [vmem:[%s3 + $0x18] sm:$0xff]
  %v358 = vld [vmem:[%s3 + $0x20] sm:$0xff]
  %v359 = vld [vmem:[%s3 + $0x28] sm:$0xff]
  %v360 = vld [vmem:[%s3 + $0x30] sm:$0xff]
  %v361 = vld [vmem:[%s3 + $0x38] sm:$0xff]
  %v362 = vld [vmem:[%s3 + $0x40] sm:$0xff]
  %v363 = vld [vmem:[%s3 + $0x48] sm:$0xff]
  %v364 = vld [vmem:[%s3 + $0x50] sm:$0xff]
  %v365 = vld [vmem:[%s3 + $0x58] sm:$0xff]
  %v366 = vld [vmem:[%s3 + $0x60] sm:$0xff]
  %v367 = vld [vmem:[%s3 + $0x68] sm:$0xff]
  %v368 = vld [vmem:[%s3 + $0x70] sm:$0xff]
  %v369 = vld [vmem:[%s3 + $0x78] sm:$0xff]
  %v370 = vld [vmem:[%s3 + $0x80] sm:$0xff]
  %v371 = vld [vmem:[%s3 + $0x88] sm:$0xff]
  %v372 = vld [vmem:[%s3 + $0x90] sm:$0xff]
  %v373 = vld [vmem:[%s3 + $0x98] sm:$0xff]
  %v374 = vld [vmem:[%s3 + $0xa0] sm:$0xff]
  %v375 = vld [vmem:[%s3 + $0xa8] sm:$0xff]
  %v376 = vld [vmem:[%s3 + $0xb0] sm:$0xff]
  %v377 = vld [vmem:[%s3 + $0xb8] sm:$0xff]
  %v378 = vld [vmem:[%s3 + $0xc0] sm:$0xff]
  %v379 = vld [vmem:[%s3 + $0xc8] sm:$0xff]
  %v380 = vld [vmem:[%s3 + $0xd0] sm:$0xff]
  %v381 = vld [vmem:[%s3 + $0xd8] sm:$0xff]
  %v382 = vld [vmem:[%s3 + $0xe0] sm:$0xff]
  %v383 = vld [vmem:[%s3 + $0xe8] sm:$0xff]
  %v384 = vld [vmem:[%s3 + $0xf0] sm:$0xff]
  %v385 = vld [vmem:[%s3 + $0xf8] sm:$0xff]
  %v386 = vld [vmem:[%s3 + $0x100] sm:$0xff]
  %v387 = vld [vmem:[%s3 + $0x108] sm:$0xff]
  %v388 = vld [vmem:[%s3 + $0x110] sm:$0xff]
  %v389 = vld [vmem:[%s3 + $0x118] sm:$0xff]
  %v390 = vld [vmem:[%s3 + $0x120] sm:$0xff]
  %v391 = vld [vmem:[%s3 + $0x128] sm:$0xff]
  %v392 = vld [vmem:[%s3 + $0x130] sm:$0xff]
  %v393 = vld [vmem:[%s3 + $0x138] sm:$0xff]
  %v394 = vld [vmem:[%s3 + $0x140] sm:$0xff]
  %v395 = vld [vmem:[%s3 + $0x148] sm:$0xff]
  %v396 = vld [vmem:[%s3 + $0x150] sm:$0xff]
  %v397 = vld [vmem:[%s3 + $0x158] sm:$0xff]
  %v398 = vld [vmem:[%s3 + $0x160] sm:$0xff]
  %v399 = vld [vmem:[%s3 + $0x168] sm:$0xff]
  %v400 = vld [vmem:[%s3 + $0x170] sm:$0xff]
  %v401 = vld [vmem:[%s3 + $0x178] sm:$0xff]
  %v402 = vld [vmem:[%s4] sm:$0x1]
  %v404 = vlaneseq
  %v405 = vshrl.u32 %v404, 7
  %v406 = vsub.s32 0, %v405
  %v407 = vrot.slane %v402, %v406
  %409 = vmatprep.subr.mxu0 0.0
  %410 = vmatpush1.msra.mxu0 %v354
  %411 = vmatprep.subr.mxu0 0.0
  %412 = vmatpush1.msra.mxu0 %v355
  %413 = vmatprep.subr.mxu0 0.0
  %414 = vmatpush1.msra.mxu0 %v356
  %415 = vmatprep.subr.mxu0 0.0
  %416 = vmatpush1.msra.mxu0 %v357
  %417 = vmatprep.subr.mxu0 0.0
  %418 = vmatpush1.msra.mxu0 %v358
  %419 = vmatprep.subr.mxu0 0.0
  %420 = vmatpush1.msra.mxu0 %v359
  %421 = vmatprep.subr.mxu0 0.0
  %422 = vmatpush1.msra.mxu0 %v360
  %423 = vmatprep.subr.mxu0 0.0
  %424 = vmatpush1.msra.mxu0 %v361
  %425 = vmatprep.subr.mxu0 0.0
  %426 = vmatpush1.msra.mxu0 %v362
  %427 = vmatprep.subr.mxu0 0.0
  %428 = vmatpush1.msra.mxu0 %v363
  %429 = vmatprep.subr.mxu0 0.0
  %430 = vmatpush1.msra.mxu0 %v364
  %431 = vmatprep.subr.mxu0 0.0
  %432 = vmatpush1.msra.mxu0 %v365
  %433 = vmatprep.subr.mxu0 0.0
  %434 = vmatpush1.msra.mxu0 %v366
  %435 = vmatprep.subr.mxu0 0.0
  %436 = vmatpush1.msra.mxu0 %v367
  %437 = vmatprep.subr.mxu0 0.0
  %438 = vmatpush1.msra.mxu0 %v368
  %439 = vmatprep.subr.mxu0 0.0
  %440 = vmatpush1.msra.mxu0 %v369
  %441 = vmatprep.subr.mxu0 0.0
  %442 = vmatpush1.msra.mxu0 %v370
  %443 = vmatprep.subr.mxu0 0.0
  %444 = vmatpush1.msra.mxu0 %v371
  %445 = vmatprep.subr.mxu0 0.0
  %446 = vmatpush1.msra.mxu0 %v372
  %447 = vmatprep.subr.mxu0 0.0
  %448 = vmatpush1.msra.mxu0 %v373
  %449 = vmatprep.subr.mxu0 0.0
  %450 = vmatpush1.msra.mxu0 %v374
  %451 = vmatprep.subr.mxu0 0.0
  %452 = vmatpush1.msra.mxu0 %v375
  %453 = vmatprep.subr.mxu0 0.0
  %454 = vmatpush1.msra.mxu0 %v376
  %455 = vmatprep.subr.mxu0 0.0
  %456 = vmatpush1.msra.mxu0 %v377
  %457 = vmatprep.subr.mxu0 0.0
  %458 = vmatpush1.msra.mxu0 %v378
  %459 = vmatprep.subr.mxu0 0.0
  %460 = vmatpush1.msra.mxu0 %v379
  %461 = vmatprep.subr.mxu0 0.0
  %462 = vmatpush1.msra.mxu0 %v380
  %463 = vmatprep.subr.mxu0 0.0
  %464 = vmatpush1.msra.mxu0 %v381
  %465 = vmatprep.subr.mxu0 0.0
  %466 = vmatpush1.msra.mxu0 %v382
  %467 = vmatprep.subr.mxu0 0.0
  %468 = vmatpush1.msra.mxu0 %v383
  %469 = vmatprep.subr.mxu0 0.0
  %470 = vmatpush1.msra.mxu0 %v384
  %471 = vmatprep.subr.mxu0 0.0
  %472 = vmatpush1.msra.mxu0 %v385
  %473 = vmatprep.mubr.f32.mxu0 %v247
  %474 = vmatmul.mubr.f32.gmra.mrb[0].mxu0 %v325
  %v475 = vpop.f32.mrb[0].mxu0
  %v476 = vadd.f32 %v407, %v475
  %v477 = vpop.f32.mrb[0].mxu0
  %478 = vmatprep.mubr.f32.mxu0 %v248
  %479 = vmatmul.mubr.f32.gmra.mrb[0].mxu0 %v326
  %v480 = vpop.f32.mrb[0].mxu0
  %v481 = vadd.f32 %v407, %v480
  %v482 = vpop.f32.mrb[0].mxu0
  %483 = vmatprep.mubr.f32.mxu0 %v249
  %484 = vmatmul.mubr.f32.gmra.mrb[0].mxu0 %v327
  %v485 = vpop.f32.mrb[0].mxu0
  %v486 = vadd.f32 %v407, %v485
  %v487 = vpop.f32.mrb[0].mxu0
  %488 = vmatprep.mubr.f32.mxu0 %v250
  %489 = vmatmul.mubr.f32.gmra.mrb[0].mxu0 %v328
  %v490 = vpop.f32.mrb[0].mxu0
  %v491 = vadd.f32 %v407, %v490
  %v492 = vpop.f32.mrb[0].mxu0
  %493 = vdwg.mxu0
  %494 = vmatprep.subr.mxu0 0.0
  %495 = vmatpush1.msra.mxu0 %v386
  %496 = vmatprep.subr.mxu0 0.0
  %497 = vmatpush1.msra.mxu0 %v387
  %498 = vmatprep.subr.mxu0 0.0
  %499 = vmatpush1.msra.mxu0 %v388
  %500 = vmatprep.subr.mxu0 0.0
  %501 = vmatpush1.msra.mxu0 %v389
  %502 = vmatprep.subr.mxu0 0.0
  %503 = vmatpush1.msra.mxu0 %v390
  %504 = vmatprep.subr.mxu0 0.0
  %505 = vmatpush1.msra.mxu0 %v391
  %506 = vmatprep.subr.mxu0 0.0
  %507 = vmatpush1.msra.mxu0 %v392
  %508 = vmatprep.subr.mxu0 0.0
  %509 = vmatpush1.msra.mxu0 %v393
  %510 = vmatprep.subr.mxu0 0.0
  %511 = vmatpush1.msra.mxu0 %v394
  %512 = vmatprep.subr.mxu0 0.0
  %513 = vmatpush1.msra.mxu0 %v395
  %514 = vmatprep.subr.mxu0 0.0
  %515 = vmatpush1.msra.mxu0 %v396
  %516 = vmatprep.subr.mxu0 0.0
  %517 = vmatpush1.msra.mxu0 %v397
  %518 = vmatprep.subr.mxu0 0.0
  %519 = vmatpush1.msra.mxu0 %v398
  %520 = vmatprep.subr.mxu0 0.0
  %521 = vmatpush1.msra.mxu0 %v399
  %522 = vmatprep.subr.mxu0 0.0
  %523 = vmatpush1.msra.mxu0 %v400
  %524 = vmatprep.subr.mxu0 0.0
  %525 = vmatpush1.msra.mxu0 %v401
  %526 = vmatprep.subr.mxu0 0.0
  %527 = vmatpush1.msra.mxu0 0.0
  %528 = vmatprep.subr.mxu0 0.0
  %529 = vmatpush1.msra.mxu0 0.0
  %530 = vmatprep.subr.mxu0 0.0
  %531 = vmatpush1.msra.mxu0 0.0
  %532 = vmatprep.subr.mxu0 0.0
  %533 = vmatpush1.msra.mxu0 0.0
  %534 = vmatprep.subr.mxu0 0.0
  %535 = vmatpush1.msra.mxu0 0.0
  %536 = vmatprep.subr.mxu0 0.0
  %537 = vmatpush1.msra.mxu0 0.0
  %538 = vmatprep.subr.mxu0 0.0
  %539 = vmatpush1.msra.mxu0 0.0
  %540 = vmatprep.subr.mxu0 0.0
  %541 = vmatpush1.msra.mxu0 0.0
  %542 = vmatprep.subr.mxu0 0.0
  %543 = vmatpush1.msra.mxu0 0.0
  %544 = vmatprep.subr.mxu0 0.0
  %545 = vmatpush1.msra.mxu0 0.0
  %546 = vmatprep.subr.mxu0 0.0
  %547 = vmatpush1.msra.mxu0 0.0
  %548 = vmatprep.subr.mxu0 0.0
  %549 = vmatpush1.msra.mxu0 0.0
  %550 = vmatprep.subr.mxu0 0.0
  %551 = vmatpush1.msra.mxu0 0.0
  %552 = vmatprep.subr.mxu0 0.0
  %553 = vmatpush1.msra.mxu0 0.0
  %554 = vmatprep.subr.mxu0 0.0
  %555 = vmatpush1.msra.mxu0 0.0
  %556 = vmatprep.subr.mxu0 0.0
  %557 = vmatpush1.msra.mxu0 0.0
  %558 = vmatprep.mubr.f32.mxu0 0.0
  %559 = vmatmul.mubr.f32.gmra.mrb[0].mxu0 %v350
  %v560 = vpop.f32.mrb[0].mxu0
  %v561 = vadd.f32 %v476, %v560
  %v562 = vpop.f32.mrb[0].mxu0
  %563 = vmatprep.mubr.f32.mxu0 0.0
  %564 = vmatmul.mubr.f32.gmra.mrb[0].mxu0 %v351
  %v565 = vpop.f32.mrb[0].mxu0
  %v566 = vadd.f32 %v481, %v565
  %v567 = vpop.f32.mrb[0].mxu0
  %568 = vmatprep.mubr.f32.mxu0 0.0
  %569 = vmatmul.mubr.f32.gmra.mrb[0].mxu0 %v352
  %v570 = vpop.f32.mrb[0].mxu0
  %v571 = vadd.f32 %v486, %v570
  %v572 = vpop.f32.mrb[0].mxu0
  %573 = vmatprep.mubr.f32.mxu0 0.0
  %574 = vmatmul.mubr.f32.gmra.mrb[0].mxu0 %v353
  %v575 = vpop.f32.mrb[0].mxu0
  %v576 = vadd.f32 %v491, %v575
  %v577 = vpop.f32.mrb[0].mxu0
  %578 = vdwg.mxu0
  %v579 = vmul.f32 %v561, 0.5
  %v580 = vmul.f32 %v566, 0.5
  %v581 = vmul.f32 %v571, 0.5
  %v582 = vmul.f32 %v576, 0.5
  %v583 = vmul.f32 %v561, 0.70710677
  %v584 = vmul.f32 %v566, 0.70710677
  %v585 = vmul.f32 %v571, 0.70710677
  %v586 = vmul.f32 %v576, 0.70710677
  %v587 = vand.u32 2147483647, %v583
  %v588 = vand.u32 2147483647, %v584
  %v589 = vand.u32 2147483647, %v585
  %v590 = vand.u32 2147483647, %v586
  %v591 = vmul.f32 %v587, 0.3275911
  %v592 = vmul.f32 %v588, 0.3275911
  %v593 = vmul.f32 %v589, 0.3275911
  %v594 = vmul.f32 %v590, 0.3275911
  %v595 = vadd.f32 %v591, 1.0
  %v596 = vadd.f32 %v592, 1.0
  %v597 = vadd.f32 %v593, 1.0
  %v598 = vadd.f32 %v594, 1.0
  %v599 = vrcp.pop %v595
  %v600 = vmul.f32 1.0, %v599
  %v601 = vrcp.pop %v596
  %v602 = vmul.f32 1.0, %v601
  %v603 = vrcp.pop %v597
  %v604 = vmul.f32 1.0, %v603
  %v605 = vrcp.pop %v598
  %v606 = vmul.f32 1.0, %v605
  %v607 = vmul.f32 %v600, 1.0614054
  %v608 = vmul.f32 %v602, 1.0614054
  %v609 = vmul.f32 %v604, 1.0614054
  %v610 = vmul.f32 %v606, 1.0614054
  %v611 = vadd.f32 %v607, -1.4531521
  %v612 = vadd.f32 %v608, -1.4531521
  %v613 = vadd.f32 %v609, -1.4531521
  %v614 = vadd.f32 %v610, -1.4531521
  %v615 = vmul.f32 %v600, %v611
  %v616 = vmul.f32 %v602, %v612
  %v617 = vmul.f32 %v604, %v613
  %v618 = vmul.f32 %v606, %v614
  %v619 = vadd.f32 %v615, 1.4214138
  %v620 = vadd.f32 %v616, 1.4214138
  %v621 = vadd.f32 %v617, 1.4214138
  %v622 = vadd.f32 %v618, 1.4214138
  %v623 = vmul.f32 %v600, %v619
  %v624 = vmul.f32 %v602, %v620
  %v625 = vmul.f32 %v604, %v621
  %v626 = vmul.f32 %v606, %v622
  %v627 = vadd.f32 %v623, -0.28449672
  %v628 = vadd.f32 %v624, -0.28449672
  %v629 = vadd.f32 %v625, -0.28449672
  %v630 = vadd.f32 %v626, -0.28449672
  %v631 = vmul.f32 %v600, %v627
  %v632 = vmul.f32 %v602, %v628
  %v633 = vmul.f32 %v604, %v629
  %v634 = vmul.f32 %v606, %v630
  %v635 = vadd.f32 %v631, 0.2548296
  %v636 = vadd.f32 %v632, 0.2548296
  %v637 = vadd.f32 %v633, 0.2548296
  %v638 = vadd.f32 %v634, 0.2548296
  %v639 = vmul.f32 %v600, %v635
  %v640 = vmul.f32 %v602, %v636
  %v641 = vmul.f32 %v604, %v637
  %v642 = vmul.f32 %v606, %v638
  %v643 = vsub.f32 0.0, %v587
  %v644 = vsub.f32 0.0, %v588
  %v645 = vsub.f32 0.0, %v589
  %v646 = vsub.f32 0.0, %v590
  %v647 = vmul.f32 %v643, %v587
  %v648 = vmul.f32 %v644, %v588
  %v649 = vmul.f32 %v645, %v589
  %v650 = vmul.f32 %v646, %v590
  %v651 = vmul.f32 %v647, 1.442695
  %v652 = vpow.pop %v651
  %v653 = vmul.f32 %v648, 1.442695
  %v654 = vpow.pop %v653
  %v655 = vmul.f32 %v649, 1.442695
  %v656 = vpow.pop %v655
  %v657 = vmul.f32 %v650, 1.442695
  %v658 = vpow.pop %v657
  %v659 = vmul.f32 %v639, %v652
  %v660 = vmul.f32 %v640, %v654
  %v661 = vmul.f32 %v641, %v656
  %v662 = vmul.f32 %v642, %v658
  %v663 = vsub.f32 1.0, %v659
  %v664 = vsub.f32 1.0, %v660
  %v665 = vsub.f32 1.0, %v661
  %v666 = vsub.f32 1.0, %v662
  %vm667 = vcmp.ge.f32.partialorder %v583, 0.0
  %vm668 = vcmp.ge.f32.partialorder %v584, 0.0
  %vm669 = vcmp.ge.f32.partialorder %v585, 0.0
  %vm670 = vcmp.ge.f32.partialorder %v586, 0.0
  %v671 = vsub.f32 0.0, %v663
  %v672 = vsub.f32 0.0, %v664
  %v673 = vsub.f32 0.0, %v665
  %v674 = vsub.f32 0.0, %v666
  %v675 = vsel %vm667, %v663, %v671
  %v676 = vsel %vm668, %v664, %v672
  %v677 = vsel %vm669, %v665, %v673
  %v678 = vsel %vm670, %v666, %v674
  %v679 = vadd.f32 %v675, 1.0
  %v680 = vadd.f32 %v676, 1.0
  %v681 = vadd.f32 %v677, 1.0
  %v682 = vadd.f32 %v678, 1.0
  %v683 = vmul.f32 %v579, %v679
  %v684 = vmul.f32 %v580, %v680
  %v685 = vmul.f32 %v581, %v681
  %v686 = vmul.f32 %v582, %v682
  %687 = vst [vmem:[#allocation2] sm:$0xff] %v683
  %688 = vst [vmem:[#allocation2 + $0x8] sm:$0xff] %v684
  %689 = vst [vmem:[#allocation2 + $0x10] sm:$0xff] %v685
  %690 = vst [vmem:[#allocation2 + $0x18] sm:$0xff] %v686
  %v691 = vld [vmem:[#allocation2] ss:$2 sm:$0xff]
  %s692 = scalar_lea.vmem [#allocation2], 16
  %v693 = vld [vmem:[%s692] ss:$2 sm:$0xff]
  %s694 = scalar_lea.vmem [#allocation2], 1
  %v695 = vld [vmem:[%s694] ss:$2 sm:$0xff]
  %s696 = scalar_lea.vmem [#allocation2], 17
  %v697 = vld [vmem:[%s696] ss:$2 sm:$0xff]
  %vm698 = vcmp.lt.s32.totalorder %v252, 0
  %v699 = vsub.s32 0, %v252
  %v700 = vsel %vm698, %v699, %v252
  %v701 = vshrl.u32 %v700, 3
  %v702 = vand.u32 %v700, 7
  %v703 = vsub.s32 0, %v702
  %v704 = vsel %vm698, %v703, %v702
  %vm705 = vcmp.lt.s32.totalorder %v253, 0
  %v706 = vsub.s32 0, %v253
  %v707 = vsel %vm705, %v706, %v253
  %v708 = vshrl.u32 %v707, 3
  %v709 = vand.u32 %v707, 7
  %v710 = vsub.s32 0, %v709
  %v711 = vsel %vm705, %v710, %v709
  %vm712 = vcmp.ne.s32.totalorder %v704, 0
  %vm713 = vcmp.ne.s32.totalorder %v711, 0
  %vm714 = vcmp.lt.s32.totalorder %v704, 0
  %vm715 = vcmp.lt.s32.totalorder %v711, 0
  %vm716 = vmand %vm714, %vm712
  %vm717 = vmand %vm715, %vm713
  %v718 = vadd.s32 %v704, 8
  %v719 = vadd.s32 %v711, 8
  %v720 = vsel %vm716, %v718, %v704
  %v721 = vsel %vm717, %v719, %v711
  %vm722 = vcmp.ge.s32.totalorder %v720, 1
  %vm723 = vcmp.ge.s32.totalorder %v721, 1
  %v724 = vrot.slane %v695, 7
  %v725 = vrot.slane %v697, 7
  %v726 = vsel %vm312, %v724, %v725
  %v727 = vsel %vm312, %v725, %v724
  %v728 = vsel %vm722, 1, 0
  %v729 = vsel %vm723, 1, 0
  %vm730 = vcmp.eq.s32.totalorder %v728, 1
  %vm731 = vcmp.eq.s32.totalorder %v729, 1
  %v732 = vsel %vm730, %v727, 0.0
  %v733 = vsel %vm731, %v726, 0.0
  %v734 = vmul.u32 %v720, 2
  %v735 = vmul.u32 %v721, 2
  %v736 = vadd.s32 %v734, 2
  %v737 = vadd.s32 %v735, 2
  %vm738 = vcmp.le.s32.totalorder %v736, 15
  %vm739 = vcmp.le.s32.totalorder %v737, 15
  %v740 = vrot.slane %v691, 1
  %v741 = vrot.slane %v693, 1
  %v742 = vsel %vm337, %v740, %v741
  %v743 = vsel %vm337, %v741, %v740
  %v744 = vsel %vm738, 1, 0
  %v745 = vsel %vm739, 1, 0
  %vm746 = vcmp.eq.s32.totalorder %v744, 1
  %vm747 = vcmp.eq.s32.totalorder %v745, 1
  %v748 = vsel %vm746, %v742, 0.0
  %v749 = vsel %vm747, %v743, 0.0
  %v750 = vld [vmem:[%s5] sm:$0xff]
  %v751 = vld [vmem:[%s5 + $0x8] sm:$0xff]
  %v752 = vld [vmem:[%s5 + $0x10] sm:$0xff]
  %v753 = vld [vmem:[%s5 + $0x18] sm:$0xff]
  %v754 = vld [vmem:[%s5 + $0x20] sm:$0xff]
  %v755 = vld [vmem:[%s5 + $0x28] sm:$0xff]
  %v756 = vld [vmem:[%s5 + $0x30] sm:$0xff]
  %v757 = vld [vmem:[%s5 + $0x38] sm:$0xff]
  %v758 = vld [vmem:[%s5 + $0x40] sm:$0xff]
  %v759 = vld [vmem:[%s5 + $0x48] sm:$0xff]
  %v760 = vld [vmem:[%s5 + $0x50] sm:$0xff]
  %v761 = vld [vmem:[%s5 + $0x58] sm:$0xff]
  %v762 = vld [vmem:[%s5 + $0x60] sm:$0xff]
  %v763 = vld [vmem:[%s5 + $0x68] sm:$0xff]
  %v764 = vld [vmem:[%s5 + $0x70] sm:$0xff]
  %v765 = vld [vmem:[%s5 + $0x78] sm:$0xff]
  %v766 = vld [vmem:[%s5 + $0x80] sm:$0xff]
  %v767 = vld [vmem:[%s5 + $0x88] sm:$0xff]
  %v768 = vld [vmem:[%s5 + $0x90] sm:$0xff]
  %v769 = vld [vmem:[%s5 + $0x98] sm:$0xff]
  %v770 = vld [vmem:[%s5 + $0xa0] sm:$0xff]
  %v771 = vld [vmem:[%s5 + $0xa8] sm:$0xff]
  %v772 = vld [vmem:[%s5 + $0xb0] sm:$0xff]
  %v773 = vld [vmem:[%s5 + $0xb8] sm:$0xff]
  %v774 = vld [vmem:[%s5 + $0xc0] sm:$0xff]
  %v775 = vld [vmem:[%s5 + $0xc8] sm:$0xff]
  %v776 = vld [vmem:[%s5 + $0xd0] sm:$0xff]
  %v777 = vld [vmem:[%s5 + $0xd8] sm:$0xff]
  %v778 = vld [vmem:[%s5 + $0xe0] sm:$0xff]
  %v779 = vld [vmem:[%s5 + $0xe8] sm:$0xff]
  %v780 = vld [vmem:[%s5 + $0xf0] sm:$0xff]
  %v781 = vld [vmem:[%s5 + $0xf8] sm:$0xff]
  %v782 = vld [vmem:[%s5 + $0x100] sm:$0xff]
  %v783 = vld [vmem:[%s5 + $0x108] sm:$0xff]
  %v784 = vld [vmem:[%s5 + $0x110] sm:$0xff]
  %v785 = vld [vmem:[%s5 + $0x118] sm:$0xff]
  %v786 = vld [vmem:[%s5 + $0x120] sm:$0xff]
  %v787 = vld [vmem:[%s5 + $0x128] sm:$0xff]
  %v788 = vld [vmem:[%s5 + $0x130] sm:$0xff]
  %v789 = vld [vmem:[%s5 + $0x138] sm:$0xff]
  %v790 = vld [vmem:[%s5 + $0x140] sm:$0xff]
  %v791 = vld [vmem:[%s5 + $0x148] sm:$0xff]
  %v792 = vld [vmem:[%s5 + $0x150] sm:$0xff]
  %v793 = vld [vmem:[%s5 + $0x158] sm:$0xff]
  %v794 = vld [vmem:[%s5 + $0x160] sm:$0xff]
  %v795 = vld [vmem:[%s5 + $0x168] sm:$0xff]
  %v796 = vld [vmem:[%s5 + $0x170] sm:$0xff]
  %v797 = vld [vmem:[%s5 + $0x178] sm:$0xff]
  %v798 = vld [vmem:[%s5 + $0x180] sm:$0xff]
  %v799 = vld [vmem:[%s5 + $0x188] sm:$0xff]
  %v800 = vld [vmem:[%s5 + $0x190] sm:$0xff]
  %v801 = vld [vmem:[%s5 + $0x198] sm:$0xff]
  %v802 = vld [vmem:[%s5 + $0x1a0] sm:$0xff]
  %v803 = vld [vmem:[%s5 + $0x1a8] sm:$0xff]
  %v804 = vld [vmem:[%s5 + $0x1b0] sm:$0xff]
  %v805 = vld [vmem:[%s5 + $0x1b8] sm:$0xff]
  %v806 = vld [vmem:[%s5 + $0x1c0] sm:$0xff]
  %v807 = vld [vmem:[%s5 + $0x1c8] sm:$0xff]
  %v808 = vld [vmem:[%s5 + $0x1d0] sm:$0xff]
  %v809 = vld [vmem:[%s5 + $0x1d8] sm:$0xff]
  %v810 = vld [vmem:[%s5 + $0x1e0] sm:$0xff]
  %v811 = vld [vmem:[%s5 + $0x1e8] sm:$0xff]
  %v812 = vld [vmem:[%s5 + $0x1f0] sm:$0xff]
  %v813 = vld [vmem:[%s5 + $0x1f8] sm:$0xff]
  %v814 = vld [vmem:[%s6] sm:$0x1]
  %v816 = vlaneseq
  %v817 = vshrl.u32 %v816, 7
  %v818 = vsub.s32 0, %v817
  %v819 = vrot.slane %v814, %v818
  %821 = vmatprep.subr.mxu0 0.0
  %822 = vmatpush1.msra.mxu0 %v750
  %823 = vmatprep.subr.mxu0 0.0
  %824 = vmatpush1.msra.mxu0 %v751
  %825 = vmatprep.subr.mxu0 0.0
  %826 = vmatpush1.msra.mxu0 %v752
  %827 = vmatprep.subr.mxu0 0.0
  %828 = vmatpush1.msra.mxu0 %v753
  %829 = vmatprep.subr.mxu0 0.0
  %830 = vmatpush1.msra.mxu0 %v754
  %831 = vmatprep.subr.mxu0 0.0
  %832 = vmatpush1.msra.mxu0 %v755
  %833 = vmatprep.subr.mxu0 0.0
  %834 = vmatpush1.msra.mxu0 %v756
  %835 = vmatprep.subr.mxu0 0.0
  %836 = vmatpush1.msra.mxu0 %v757
  %837 = vmatprep.subr.mxu0 0.0
  %838 = vmatpush1.msra.mxu0 %v758
  %839 = vmatprep.subr.mxu0 0.0
  %840 = vmatpush1.msra.mxu0 %v759
  %841 = vmatprep.subr.mxu0 0.0
  %842 = vmatpush1.msra.mxu0 %v760
  %843 = vmatprep.subr.mxu0 0.0
  %844 = vmatpush1.msra.mxu0 %v761
  %845 = vmatprep.subr.mxu0 0.0
  %846 = vmatpush1.msra.mxu0 %v762
  %847 = vmatprep.subr.mxu0 0.0
  %848 = vmatpush1.msra.mxu0 %v763
  %849 = vmatprep.subr.mxu0 0.0
  %850 = vmatpush1.msra.mxu0 %v764
  %851 = vmatprep.subr.mxu0 0.0
  %852 = vmatpush1.msra.mxu0 %v765
  %853 = vmatprep.subr.mxu0 0.0
  %854 = vmatpush1.msra.mxu0 %v766
  %855 = vmatprep.subr.mxu0 0.0
  %856 = vmatpush1.msra.mxu0 %v767
  %857 = vmatprep.subr.mxu0 0.0
  %858 = vmatpush1.msra.mxu0 %v768
  %859 = vmatprep.subr.mxu0 0.0
  %860 = vmatpush1.msra.mxu0 %v769
  %861 = vmatprep.subr.mxu0 0.0
  %862 = vmatpush1.msra.mxu0 %v770
  %863 = vmatprep.subr.mxu0 0.0
  %864 = vmatpush1.msra.mxu0 %v771
  %865 = vmatprep.subr.mxu0 0.0
  %866 = vmatpush1.msra.mxu0 %v772
  %867 = vmatprep.subr.mxu0 0.0
  %868 = vmatpush1.msra.mxu0 %v773
  %869 = vmatprep.subr.mxu0 0.0
  %870 = vmatpush1.msra.mxu0 %v774
  %871 = vmatprep.subr.mxu0 0.0
  %872 = vmatpush1.msra.mxu0 %v775
  %873 = vmatprep.subr.mxu0 0.0
  %874 = vmatpush1.msra.mxu0 %v776
  %875 = vmatprep.subr.mxu0 0.0
  %876 = vmatpush1.msra.mxu0 %v777
  %877 = vmatprep.subr.mxu0 0.0
  %878 = vmatpush1.msra.mxu0 %v778
  %879 = vmatprep.subr.mxu0 0.0
  %880 = vmatpush1.msra.mxu0 %v779
  %881 = vmatprep.subr.mxu0 0.0
  %882 = vmatpush1.msra.mxu0 %v780
  %883 = vmatprep.subr.mxu0 0.0
  %884 = vmatpush1.msra.mxu0 %v781
  %885 = vmatprep.mubr.f32.mxu0 %v691
  %886 = vmatmul.mubr.f32.gmra.mrb[0].mxu0 %v732
  %v887 = vpop.f32.mrb[0].mxu0
  %v888 = vadd.f32 %v819, %v887
  %v889 = vpop.f32.mrb[0].mxu0
  %890 = vmatprep.mubr.f32.mxu0 %v693
  %891 = vmatmul.mubr.f32.gmra.mrb[0].mxu0 %v733
  %v892 = vpop.f32.mrb[0].mxu0
  %v893 = vadd.f32 %v819, %v892
  %v894 = vpop.f32.mrb[0].mxu0
  %895 = vdwg.mxu0
  %896 = vmatprep.subr.mxu0 0.0
  %897 = vmatpush1.msra.mxu0 %v782
  %898 = vmatprep.subr.mxu0 0.0
  %899 = vmatpush1.msra.mxu0 %v783
  %900 = vmatprep.subr.mxu0 0.0
  %901 = vmatpush1.msra.mxu0 %v784
  %902 = vmatprep.subr.mxu0 0.0
  %903 = vmatpush1.msra.mxu0 %v785
  %904 = vmatprep.subr.mxu0 0.0
  %905 = vmatpush1.msra.mxu0 %v786
  %906 = vmatprep.subr.mxu0 0.0
  %907 = vmatpush1.msra.mxu0 %v787
  %908 = vmatprep.subr.mxu0 0.0
  %909 = vmatpush1.msra.mxu0 %v788
  %910 = vmatprep.subr.mxu0 0.0
  %911 = vmatpush1.msra.mxu0 %v789
  %912 = vmatprep.subr.mxu0 0.0
  %913 = vmatpush1.msra.mxu0 %v790
  %914 = vmatprep.subr.mxu0 0.0
  %915 = vmatpush1.msra.mxu0 %v791
  %916 = vmatprep.subr.mxu0 0.0
  %917 = vmatpush1.msra.mxu0 %v792
  %918 = vmatprep.subr.mxu0 0.0
  %919 = vmatpush1.msra.mxu0 %v793
  %920 = vmatprep.subr.mxu0 0.0
  %921 = vmatpush1.msra.mxu0 %v794
  %922 = vmatprep.subr.mxu0 0.0
  %923 = vmatpush1.msra.mxu0 %v795
  %924 = vmatprep.subr.mxu0 0.0
  %925 = vmatpush1.msra.mxu0 %v796
  %926 = vmatprep.subr.mxu0 0.0
  %927 = vmatpush1.msra.mxu0 %v797
  %928 = vmatprep.subr.mxu0 0.0
  %929 = vmatpush1.msra.mxu0 %v798
  %930 = vmatprep.subr.mxu0 0.0
  %931 = vmatpush1.msra.mxu0 %v799
  %932 = vmatprep.subr.mxu0 0.0
  %933 = vmatpush1.msra.mxu0 %v800
  %934 = vmatprep.subr.mxu0 0.0
  %935 = vmatpush1.msra.mxu0 %v801
  %936 = vmatprep.subr.mxu0 0.0
  %937 = vmatpush1.msra.mxu0 %v802
  %938 = vmatprep.subr.mxu0 0.0
  %939 = vmatpush1.msra.mxu0 %v803
  %940 = vmatprep.subr.mxu0 0.0
  %941 = vmatpush1.msra.mxu0 %v804
  %942 = vmatprep.subr.mxu0 0.0
  %943 = vmatpush1.msra.mxu0 %v805
  %944 = vmatprep.subr.mxu0 0.0
  %945 = vmatpush1.msra.mxu0 %v806
  %946 = vmatprep.subr.mxu0 0.0
  %947 = vmatpush1.msra.mxu0 %v807
  %948 = vmatprep.subr.mxu0 0.0
  %949 = vmatpush1.msra.mxu0 %v808
  %950 = vmatprep.subr.mxu0 0.0
  %951 = vmatpush1.msra.mxu0 %v809
  %952 = vmatprep.subr.mxu0 0.0
  %953 = vmatpush1.msra.mxu0 %v810
  %954 = vmatprep.subr.mxu0 0.0
  %955 = vmatpush1.msra.mxu0 %v811
  %956 = vmatprep.subr.mxu0 0.0
  %957 = vmatpush1.msra.mxu0 %v812
  %958 = vmatprep.subr.mxu0 0.0
  %959 = vmatpush1.msra.mxu0 %v813
  %960 = vmatprep.mubr.f32.mxu0 %v748
  %961 = vmatmul.mubr.f32.gmra.mrb[0].mxu0 %v695
  %v962 = vpop.f32.mrb[0].mxu0
  %v963 = vadd.f32 %v888, %v962
  %v964 = vpop.f32.mrb[0].mxu0
  %965 = vmatprep.mubr.f32.mxu0 %v749
  %966 = vmatmul.mubr.f32.gmra.mrb[0].mxu0 %v697
  %v967 = vpop.f32.mrb[0].mxu0
  %v968 = vadd.f32 %v893, %v967
  %v969 = vpop.f32.mrb[0].mxu0
  %970 = vdwg.mxu0
  %v971 = vmul.f32 %v963, 0.5
  %v972 = vmul.f32 %v968, 0.5
  %v973 = vmul.f32 %v963, 0.70710677
  %v974 = vmul.f32 %v968, 0.70710677
  %v975 = vand.u32 2147483647, %v973
  %v976 = vand.u32 2147483647, %v974
  %v977 = vmul.f32 %v975, 0.3275911
  %v978 = vmul.f32 %v976, 0.3275911
  %v979 = vadd.f32 %v977, 1.0
  %v980 = vadd.f32 %v978, 1.0
  %v981 = vrcp.pop %v979
  %v982 = vmul.f32 1.0, %v981
  %v983 = vrcp.pop %v980
  %v984 = vmul.f32 1.0, %v983
  %v985 = vmul.f32 %v982, 1.0614054
  %v986 = vmul.f32 %v984, 1.0614054
  %v987 = vadd.f32 %v985, -1.4531521
  %v988 = vadd.f32 %v986, -1.4531521
  %v989 = vmul.f32 %v982, %v987
  %v990 = vmul.f32 %v984, %v988
  %v991 = vadd.f32 %v989, 1.4214138
  %v992 = vadd.f32 %v990, 1.4214138
  %v993 = vmul.f32 %v982, %v991
  %v994 = vmul.f32 %v984, %v992
  %v995 = vadd.f32 %v993, -0.28449672
  %v996 = vadd.f32 %v994, -0.28449672
  %v997 = vmul.f32 %v982, %v995
  %v998 = vmul.f32 %v984, %v996
  %v999 = vadd.f32 %v997, 0.2548296
  %v1000 = vadd.f32 %v998, 0.2548296
  %v1001 = vmul.f32 %v982, %v999
  %v1002 = vmul.f32 %v984, %v1000
  %v1003 = vsub.f32 0.0, %v975
  %v1004 = vsub.f32 0.0, %v976
  %v1005 = vmul.f32 %v1003, %v975
  %v1006 = vmul.f32 %v1004, %v976
  %v1007 = vmul.f32 %v1005, 1.442695
  %v1008 = vpow.pop %v1007
  %v1009 = vmul.f32 %v1006, 1.442695
  %v1010 = vpow.pop %v1009
  %v1011 = vmul.f32 %v1001, %v1008
  %v1012 = vmul.f32 %v1002, %v1010
  %v1013 = vsub.f32 1.0, %v1011
  %v1014 = vsub.f32 1.0, %v1012
  %vm1015 = vcmp.ge.f32.partialorder %v973, 0.0
  %vm1016 = vcmp.ge.f32.partialorder %v974, 0.0
  %v1017 = vsub.f32 0.0, %v1013
  %v1018 = vsub.f32 0.0, %v1014
  %v1019 = vsel %vm1015, %v1013, %v1017
  %v1020 = vsel %vm1016, %v1014, %v1018
  %v1021 = vadd.f32 %v1019, 1.0
  %v1022 = vadd.f32 %v1020, 1.0
  %v1023 = vmul.f32 %v971, %v1021
  %v1024 = vmul.f32 %v972, %v1022
  %1025 = vst.msk [vmem:[#allocation3] sm:$0xff] %vm45, %v1023
  %1026 = vst.msk [vmem:[#allocation3 + $0x8] sm:$0xff] %vm45, %v1024
  %v1027 = vld [vmem:[#allocation3] ss:$2 sm:$0xff]
  %s1028 = scalar_lea.vmem [#allocation3], 1
  %v1029 = vld [vmem:[%s1028] ss:$2 sm:$0xff]
  %1031 = vrot.lane.b32.xlu0 %v1029, 64
  %v1032 = vpop.permute.xlu0 %1031
  %v1034 = vsel %vm45, %v1027, %v1032
  %1035 = vst [vmem:[%s7] sm:$0xff] %v1034
  // Predicated region
  $region30: #{aggregation_block_forward.1} parent=0 // pred_check
    _
  $region31: #{aggregation_block_forward.1} parent=0 // pred_check_branch
    %1037 = sbr.rel (0) target = $region33
  $region32: #{aggregation_block_forward.1} parent=0 // pred_region
    _
  $region33: #{aggregation_block_forward.1} parent=0 // pred_fallthru
    _
  // Predicated region
  $region34: #{aggregation_block_forward.1} parent=0 // pred_check
    _
  $region35: #{aggregation_block_forward.1} parent=0 // pred_check_branch
    %1039 = sbr.rel (0) target = $region37
  $region36: #{aggregation_block_forward.1} parent=0 // pred_region
    _
  $region37: #{aggregation_block_forward.1} parent=0 // pred_fallthru
    _

</llo_original>
